<compile_context>
chip_gen: v7x
topology: tpu7x:2x2x1
jax: 0.10.0
libtpu: 0.0.40
codegen_flags: <defaults>
</compile_context>

<pallas_src>
import math
from functools import partial

import numpy as np
import jax
import jax.numpy as jnp
from jax import lax
from jax.experimental import pallas as pl
from jax.experimental.pallas import tpu as pltpu


# ----------------------------------------------------------------------------
# Fused kernel: one batch element per grid step, everything resident in VMEM.
# ----------------------------------------------------------------------------
def _cross_attention_kernel(q_ref, k_ref, v_ref, wq_ref, wk_ref, wvp_ref,
                            wo_ref, bvp_ref, vec_ref, o_ref, *, scale, fold):
    f32 = jnp.float32
    dn = (((1,), (1,)), ((), ()))          # x @ W^T for PyTorch (out, in) weights

    q_in = q_ref[0]                        # (sq,  d)
    k_in = k_ref[0]                        # (skv, d)
    v_in = v_ref[0]                        # (skv, d)
    sq = q_in.shape[0]

    vecs = vec_ref[...].astype(f32)        # (5, d): bq, bk, bo, gamma, beta
    bq, bk, bo = vecs[0:1], vecs[1:2], vecs[2:3]
    gamma, beta = vecs[3:4], vecs[4:5]
    bvp = bvp_ref[...].astype(f32)         # (d, 1): permuted bv, column layout

    # Projections on the MXU with f32 accumulation.
    Q = lax.dot_general(q_in, wq_ref[...], dn, preferred_element_type=f32) + bq
    K = lax.dot_general(k_in, wk_ref[...], dn, preferred_element_type=f32) + bk
    # V is produced directly in transposed-and-permuted orientation:
    #   vpt[x, m] = V[m, pi(x)]   (pi folded into the rows of Wv / entries of bv)
    vpt = lax.dot_general(wvp_ref[...], v_in, dn, preferred_element_type=f32) + bvp

    # Scaled softmax attention over the full embed dim (heads are not split).
    dots = lax.dot_general(Q, K, dn, preferred_element_type=f32)        # (sq, skv)
    s = dots * scale
    m = jnp.max(s, axis=-1, keepdims=True)
    p = jnp.exp(s - m)
    attn = p * pl.reciprocal(jnp.sum(p, axis=-1, keepdims=True), approx=True)

    # at_perm[x, t] = A[t, pi(x)], where A = attn @ V is the module's attention out.
    at_perm = lax.dot_general(vpt, attn, dn, preferred_element_type=f32)  # (d, sq)

    # output.transpose(1,2).contiguous().view(b, sq, d) followed by Wo:
    # row block j of at_perm is exactly the j-th lane-group of the permuted view, so
    # the output projection is a sum of `fold` small rhs-transposed matmuls against
    # the matching pre-split Wo column groups.
    out = bo                                                              # (1, d)
    for j in range(fold):
        out = out + lax.dot_general(at_perm[j * sq:(j + 1) * sq, :], wo_ref[j],
                                    dn, preferred_element_type=f32)       # (sq, d)

    # Residual + LayerNorm (eps=1e-5, affine), all in f32.
    x = q_in.astype(f32) + out
    mu = jnp.mean(x, axis=-1, keepdims=True)
    var = jnp.mean(jnp.square(x - mu), axis=-1, keepdims=True)
    y = (x - mu) * lax.rsqrt(var + 1e-5)
    o_ref[0] = (y * gamma + beta).astype(o_ref.dtype)


# ----------------------------------------------------------------------------
# Public wrapper.
# ----------------------------------------------------------------------------
def cross_attention_forward(query, key, value, params):
    """CrossAttention forward.  query: (b, sq, d); key/value: (b, skv, d)."""
    b, sq, d = query.shape
    skv = key.shape[1]
    if d % sq != 0:
        # TODO(synk): when embed_size % seq_len_q != 0 the transpose(1,2).view
        # scramble crosses row boundaries; that path is not implemented fused.
        raise NotImplementedError("fused kernel needs embed_size % seq_len_q == 0")
    fold = d // sq
    scale = 1.0 / math.sqrt(d)

    # One-time parameter re-arrangement (tiny tensors; in a real model this is done
    # at parameter-prep time).  pi(x) = fold*(x % sq) + x // sq makes the rows of
    # A^T needed by each output row contiguous, so the in-kernel permutation is
    # pure tile-aligned slicing.
    perm = (np.arange(d) % sq) * fold + (np.arange(d) // sq)
    wv_perm = params["Wv"][perm, :]                                   # (d, d)
    bv_col = params["bv"][perm].reshape(d, 1)                         # (d, 1)
    wo_stack = params["Wo"].reshape(d, fold, sq).transpose(1, 0, 2)   # (fold, d, sq)
    vec5 = jnp.stack([params["bq"], params["bk"], params["bo"],
                      params["gamma"], params["beta"]], axis=0)       # (5, d)

    itemsize = jnp.dtype(query.dtype).itemsize
    flops = 2 * b * ((sq + 2 * skv) * d * d + 2 * sq * skv * d + sq * d * d)
    bytes_accessed = itemsize * (b * (sq + 2 * skv) * d    # q, k, v
                                 + 4 * d * d + 6 * d       # weights + vectors
                                 + b * sq * d)             # output
    cost = pl.CostEstimate(flops=int(flops),
                           transcendentals=int(b * sq * skv),
                           bytes_accessed=int(bytes_accessed))

    kernel = partial(_cross_attention_kernel, scale=scale, fold=fold)
    return pl.pallas_call(
        kernel,
        out_shape=jax.ShapeDtypeStruct((b, sq, d), query.dtype),
        grid=(b,),
        in_specs=[
            pl.BlockSpec((1, sq, d), lambda i: (i, 0, 0)),     # query
            pl.BlockSpec((1, skv, d), lambda i: (i, 0, 0)),    # key
            pl.BlockSpec((1, skv, d), lambda i: (i, 0, 0)),    # value
            pl.BlockSpec((d, d), lambda i: (0, 0)),            # Wq  (out, in)
            pl.BlockSpec((d, d), lambda i: (0, 0)),            # Wk  (out, in)
            pl.BlockSpec((d, d), lambda i: (0, 0)),            # Wv  row-permuted
            pl.BlockSpec((fold, d, sq), lambda i: (0, 0, 0)),  # Wo  column groups
            pl.BlockSpec((d, 1), lambda i: (0, 0)),            # bv  (permuted col)
            pl.BlockSpec((5, d), lambda i: (0, 0)),            # bq,bk,bo,gamma,beta
        ],
        out_specs=pl.BlockSpec((1, sq, d), lambda i: (i, 0, 0)),
        compiler_params=pltpu.CompilerParams(dimension_semantics=("parallel",)),
        cost_estimate=cost,
    )(query, key, value, params["Wq"], params["Wk"], wv_perm, wo_stack,
      bv_col, vec5)


# ----------------------------------------------------------------------------
# Pure-JAX reference (mirrors the PyTorch module) for correctness checking.
# ----------------------------------------------------------------------------
def _reference_forward(query, key, value, params):
    def linear(x, w, bias):
        return jnp.dot(x, w.T) + bias

    Q = linear(query, params["Wq"], params["bq"])
    K = linear(key, params["Wk"], params["bk"])
    V = linear(value, params["Wv"], params["bv"])
    scale = 1.0 / math.sqrt(Q.shape[-1])
    dots = jnp.einsum('bqd,bkd->bqk', Q, K)
    attn = jax.nn.softmax(dots * scale, axis=-1)
    out = jnp.einsum('bqk,bkv->bqv', attn, V)
    b_, sq, d = out.shape
    out = jnp.transpose(out, (0, 2, 1)).reshape(b_, sq, d)  # transpose(1,2).view
    out = linear(out, params["Wo"], params["bo"])
    x = query + out
    mean = jnp.mean(x, axis=-1, keepdims=True)
    var = jnp.mean((x - mean) ** 2, axis=-1, keepdims=True)
    return (x - mean) * lax.rsqrt(var + 1e-5) * params["gamma"] + params["beta"]


if __name__ == "__main__":
    # CrossAttention(embed_size=32, num_heads=4) — num_heads is unused by the
    # module's forward math (attention runs over the full embed dim).
    B, SQ, SKV, D = 2, 8, 16, 32

    root = jax.random.PRNGKey(0)
    keys = jax.random.split(root, 13)
    bound = 1.0 / math.sqrt(D)   # PyTorch nn.Linear default init bound

    params = {
        "Wq": jax.random.uniform(keys[0], (D, D), jnp.float32, -bound, bound),
        "bq": jax.random.uniform(keys[1], (D,), jnp.float32, -bound, bound),
        "Wk": jax.random.uniform(keys[2], (D, D), jnp.float32, -bound, bound),
        "bk": jax.random.uniform(keys[3], (D,), jnp.float32, -bound, bound),
        "Wv": jax.random.uniform(keys[4], (D, D), jnp.float32, -bound, bound),
        "bv": jax.random.uniform(keys[5], (D,), jnp.float32, -bound, bound),
        "Wo": jax.random.uniform(keys[6], (D, D), jnp.float32, -bound, bound),
        "bo": jax.random.uniform(keys[7], (D,), jnp.float32, -bound, bound),
        "gamma": 1.0 + 0.1 * jax.random.normal(keys[8], (D,), jnp.float32),
        "beta": 0.1 * jax.random.normal(keys[9], (D,), jnp.float32),
    }

    query = jax.random.normal(keys[10], (B, SQ, D), jnp.float32)
    key_in = jax.random.normal(keys[11], (B, SKV, D), jnp.float32)
    value = jax.random.normal(keys[12], (B, SKV, D), jnp.float32)

    out = cross_attention_forward(query, key_in, value, params)
    out = jax.block_until_ready(out)

    ref = _reference_forward(query, key_in, value, params)
    err = float(jnp.max(jnp.abs(out - ref)))
    assert out.shape == (B, SQ, D), out.shape
    # approx-reciprocal softmax denominator (perf feedback) relaxes the bound a bit.
    assert err < 2e-3, f"max abs err too large: {err}"

    print("KERNEL_OK")
</pallas_src>

<mosaic_0001>
module attributes {stable_mosaic.version = 11 : i64} {
  func.func @_cross_attention_kernel(%arg0: i32, %arg1: memref<1x8x32xf32, #tpu.memory_space<vmem>>, %arg2: memref<1x16x32xf32, #tpu.memory_space<vmem>>, %arg3: memref<1x16x32xf32, #tpu.memory_space<vmem>>, %arg4: memref<32x32xf32, #tpu.memory_space<vmem>>, %arg5: memref<32x32xf32, #tpu.memory_space<vmem>>, %arg6: memref<32x32xf32, #tpu.memory_space<vmem>>, %arg7: memref<4x32x8xf32, #tpu.memory_space<vmem>>, %arg8: memref<32x1xf32, #tpu.memory_space<vmem>>, %arg9: memref<5x32xf32, #tpu.memory_space<vmem>>, %arg10: memref<1x8x32xf32, #tpu.memory_space<vmem>>) attributes {dimension_semantics = [#tpu.dimension_semantics<parallel>], iteration_bounds = array<i64: 2>, scalar_prefetch = 0 : i64, scratch_operands = 0 : i64, tpu.core_type = #tpu.core_type<tc>, window_params = [{transform_indices = @transform_0, window_bounds = array<i64: 1, 8, 32>}, {transform_indices = @transform_1, window_bounds = array<i64: 1, 16, 32>}, {transform_indices = @transform_2, window_bounds = array<i64: 1, 16, 32>}, {pipeline_mode = #tpu.pipeline_mode<synchronous>, transform_indices = @transform_3, window_bounds = array<i64: 32, 32>}, {pipeline_mode = #tpu.pipeline_mode<synchronous>, transform_indices = @transform_4, window_bounds = array<i64: 32, 32>}, {pipeline_mode = #tpu.pipeline_mode<synchronous>, transform_indices = @transform_5, window_bounds = array<i64: 32, 32>}, {pipeline_mode = #tpu.pipeline_mode<synchronous>, transform_indices = @transform_6, window_bounds = array<i64: 4, 32, 8>}, {pipeline_mode = #tpu.pipeline_mode<synchronous>, transform_indices = @transform_7, window_bounds = array<i64: 32, 1>}, {pipeline_mode = #tpu.pipeline_mode<synchronous>, transform_indices = @transform_8, window_bounds = array<i64: 5, 32>}, {transform_indices = @transform_9, window_bounds = array<i64: 1, 8, 32>}]} {
    %c0 = arith.constant 0 : index
    %c0_0 = arith.constant 0 : index
    %c0_1 = arith.constant 0 : index
    %0 = vector.load %arg1[%c0, %c0_0, %c0_1] : memref<1x8x32xf32, #tpu.memory_space<vmem>>, vector<1x8x32xf32>
    %1 = vector.shape_cast %0 : vector<1x8x32xf32> to vector<8x32xf32>
    %c0_2 = arith.constant 0 : index
    %c0_3 = arith.constant 0 : index
    %c0_4 = arith.constant 0 : index
    %2 = vector.load %arg2[%c0_2, %c0_3, %c0_4] : memref<1x16x32xf32, #tpu.memory_space<vmem>>, vector<1x16x32xf32>
    %3 = vector.shape_cast %2 : vector<1x16x32xf32> to vector<16x32xf32>
    %c0_5 = arith.constant 0 : index
    %c0_6 = arith.constant 0 : index
    %c0_7 = arith.constant 0 : index
    %4 = vector.load %arg3[%c0_5, %c0_6, %c0_7] : memref<1x16x32xf32, #tpu.memory_space<vmem>>, vector<1x16x32xf32>
    %5 = vector.shape_cast %4 : vector<1x16x32xf32> to vector<16x32xf32>
    %c0_8 = arith.constant 0 : index
    %c0_9 = arith.constant 0 : index
    %6 = vector.load %arg9[%c0_8, %c0_9] : memref<5x32xf32, #tpu.memory_space<vmem>>, vector<5x32xf32>
    %7 = vector.extract_strided_slice %6 {offsets = [0, 0], sizes = [1, 32], strides = [1, 1]} : vector<5x32xf32> to vector<1x32xf32>
    %8 = vector.extract_strided_slice %6 {offsets = [1, 0], sizes = [1, 32], strides = [1, 1]} : vector<5x32xf32> to vector<1x32xf32>
    %9 = vector.extract_strided_slice %6 {offsets = [2, 0], sizes = [1, 32], strides = [1, 1]} : vector<5x32xf32> to vector<1x32xf32>
    %10 = vector.extract_strided_slice %6 {offsets = [3, 0], sizes = [1, 32], strides = [1, 1]} : vector<5x32xf32> to vector<1x32xf32>
    %11 = vector.extract_strided_slice %6 {offsets = [4, 0], sizes = [1, 32], strides = [1, 1]} : vector<5x32xf32> to vector<1x32xf32>
    %c0_10 = arith.constant 0 : index
    %c0_11 = arith.constant 0 : index
    %12 = vector.load %arg8[%c0_10, %c0_11] : memref<32x1xf32, #tpu.memory_space<vmem>>, vector<32x1xf32>
    %c0_12 = arith.constant 0 : index
    %c0_13 = arith.constant 0 : index
    %13 = vector.load %arg4[%c0_12, %c0_13] : memref<32x32xf32, #tpu.memory_space<vmem>>, vector<32x32xf32>
    %cst = arith.constant dense<0.000000e+00> : vector<8x32xf32>
    %14 = tpu.matmul %1, %13, %cst {dimension_numbers = #tpu.dot_dimension_numbers<[1], [1], [0], [0], [0, 0, 1, 0], [], []>} : vector<8x32xf32>, vector<32x32xf32>, vector<8x32xf32> -> vector<8x32xf32>
    %15 = vector.broadcast %7 : vector<1x32xf32> to vector<8x32xf32>
    %16 = arith.addf %14, %15 : vector<8x32xf32>
    %c0_14 = arith.constant 0 : index
    %c0_15 = arith.constant 0 : index
    %17 = vector.load %arg5[%c0_14, %c0_15] : memref<32x32xf32, #tpu.memory_space<vmem>>, vector<32x32xf32>
    %cst_16 = arith.constant dense<0.000000e+00> : vector<16x32xf32>
    %18 = tpu.matmul %3, %17, %cst_16 {dimension_numbers = #tpu.dot_dimension_numbers<[1], [1], [0], [0], [0, 0, 1, 0], [], []>} : vector<16x32xf32>, vector<32x32xf32>, vector<16x32xf32> -> vector<16x32xf32>
    %19 = vector.broadcast %8 : vector<1x32xf32> to vector<16x32xf32>
    %20 = arith.addf %18, %19 : vector<16x32xf32>
    %c0_17 = arith.constant 0 : index
    %c0_18 = arith.constant 0 : index
    %21 = vector.load %arg6[%c0_17, %c0_18] : memref<32x32xf32, #tpu.memory_space<vmem>>, vector<32x32xf32>
    %cst_19 = arith.constant dense<0.000000e+00> : vector<32x16xf32>
    %22 = tpu.matmul %21, %5, %cst_19 {dimension_numbers = #tpu.dot_dimension_numbers<[1], [1], [0], [0], [0, 0, 1, 0], [], []>} : vector<32x32xf32>, vector<16x32xf32>, vector<32x16xf32> -> vector<32x16xf32>
    %23 = vector.broadcast %12 : vector<32x1xf32> to vector<32x16xf32>
    %24 = arith.addf %22, %23 : vector<32x16xf32>
    %cst_20 = arith.constant dense<0.000000e+00> : vector<8x16xf32>
    %25 = tpu.matmul %16, %20, %cst_20 {dimension_numbers = #tpu.dot_dimension_numbers<[1], [1], [0], [0], [0, 0, 1, 0], [], []>} : vector<8x32xf32>, vector<16x32xf32>, vector<8x16xf32> -> vector<8x16xf32>
    %cst_21 = arith.constant 0.176776692 : f32
    %26 = vector.broadcast %cst_21 : f32 to vector<8x16xf32>
    %27 = arith.mulf %25, %26 : vector<8x16xf32>
    %cst_22 = arith.constant dense<0xFF800000> : vector<8xf32>
    %28 = vector.multi_reduction <maximumf>, %27, %cst_22 [1] : vector<8x16xf32> to vector<8xf32>
    %29 = vector.shape_cast %28 : vector<8xf32> to vector<8x1xf32>
    %30 = vector.broadcast %29 : vector<8x1xf32> to vector<8x16xf32>
    %31 = arith.subf %27, %30 : vector<8x16xf32>
    %32 = math.exp %31 : vector<8x16xf32>
    %cst_23 = arith.constant dense<0.000000e+00> : vector<8xf32>
    %33 = vector.multi_reduction <add>, %32, %cst_23 [1] : vector<8x16xf32> to vector<8xf32>
    %34 = vector.shape_cast %33 : vector<8xf32> to vector<8x1xf32>
    %35 = tpu.reciprocal %34 {approx = true} : vector<8x1xf32> -> vector<8x1xf32>
    %36 = vector.broadcast %35 : vector<8x1xf32> to vector<8x16xf32>
    %37 = arith.mulf %32, %36 : vector<8x16xf32>
    %cst_24 = arith.constant dense<0.000000e+00> : vector<32x8xf32>
    %38 = tpu.matmul %24, %37, %cst_24 {dimension_numbers = #tpu.dot_dimension_numbers<[1], [1], [0], [0], [0, 0, 1, 0], [], []>} : vector<32x16xf32>, vector<8x16xf32>, vector<32x8xf32> -> vector<32x8xf32>
    %39 = vector.extract_strided_slice %38 {offsets = [0, 0], sizes = [8, 8], strides = [1, 1]} : vector<32x8xf32> to vector<8x8xf32>
    %c0_25 = arith.constant 0 : index
    %c0_26 = arith.constant 0 : index
    %c0_27 = arith.constant 0 : index
    %40 = vector.load %arg7[%c0_25, %c0_26, %c0_27] : memref<4x32x8xf32, #tpu.memory_space<vmem>>, vector<1x32x8xf32>
    %41 = vector.shape_cast %40 : vector<1x32x8xf32> to vector<32x8xf32>
    %cst_28 = arith.constant dense<0.000000e+00> : vector<8x32xf32>
    %42 = tpu.matmul %39, %41, %cst_28 {dimension_numbers = #tpu.dot_dimension_numbers<[1], [1], [0], [0], [0, 0, 1, 0], [], []>} : vector<8x8xf32>, vector<32x8xf32>, vector<8x32xf32> -> vector<8x32xf32>
    %43 = vector.broadcast %9 : vector<1x32xf32> to vector<8x32xf32>
    %44 = arith.addf %43, %42 : vector<8x32xf32>
    %45 = vector.extract_strided_slice %38 {offsets = [8, 0], sizes = [8, 8], strides = [1, 1]} : vector<32x8xf32> to vector<8x8xf32>
    %c1 = arith.constant 1 : index
    %c0_29 = arith.constant 0 : index
    %c0_30 = arith.constant 0 : index
    %46 = vector.load %arg7[%c1, %c0_29, %c0_30] : memref<4x32x8xf32, #tpu.memory_space<vmem>>, vector<1x32x8xf32>
    %47 = vector.shape_cast %46 : vector<1x32x8xf32> to vector<32x8xf32>
    %cst_31 = arith.constant dense<0.000000e+00> : vector<8x32xf32>
    %48 = tpu.matmul %45, %47, %cst_31 {dimension_numbers = #tpu.dot_dimension_numbers<[1], [1], [0], [0], [0, 0, 1, 0], [], []>} : vector<8x8xf32>, vector<32x8xf32>, vector<8x32xf32> -> vector<8x32xf32>
    %49 = arith.addf %44, %48 : vector<8x32xf32>
    %50 = vector.extract_strided_slice %38 {offsets = [16, 0], sizes = [8, 8], strides = [1, 1]} : vector<32x8xf32> to vector<8x8xf32>
    %c2 = arith.constant 2 : index
    %c0_32 = arith.constant 0 : index
    %c0_33 = arith.constant 0 : index
    %51 = vector.load %arg7[%c2, %c0_32, %c0_33] : memref<4x32x8xf32, #tpu.memory_space<vmem>>, vector<1x32x8xf32>
    %52 = vector.shape_cast %51 : vector<1x32x8xf32> to vector<32x8xf32>
    %cst_34 = arith.constant dense<0.000000e+00> : vector<8x32xf32>
    %53 = tpu.matmul %50, %52, %cst_34 {dimension_numbers = #tpu.dot_dimension_numbers<[1], [1], [0], [0], [0, 0, 1, 0], [], []>} : vector<8x8xf32>, vector<32x8xf32>, vector<8x32xf32> -> vector<8x32xf32>
    %54 = arith.addf %49, %53 : vector<8x32xf32>
    %55 = vector.extract_strided_slice %38 {offsets = [24, 0], sizes = [8, 8], strides = [1, 1]} : vector<32x8xf32> to vector<8x8xf32>
    %c3 = arith.constant 3 : index
    %c0_35 = arith.constant 0 : index
    %c0_36 = arith.constant 0 : index
    %56 = vector.load %arg7[%c3, %c0_35, %c0_36] : memref<4x32x8xf32, #tpu.memory_space<vmem>>, vector<1x32x8xf32>
    %57 = vector.shape_cast %56 : vector<1x32x8xf32> to vector<32x8xf32>
    %cst_37 = arith.constant dense<0.000000e+00> : vector<8x32xf32>
    %58 = tpu.matmul %55, %57, %cst_37 {dimension_numbers = #tpu.dot_dimension_numbers<[1], [1], [0], [0], [0, 0, 1, 0], [], []>} : vector<8x8xf32>, vector<32x8xf32>, vector<8x32xf32> -> vector<8x32xf32>
    %59 = arith.addf %54, %58 : vector<8x32xf32>
    %60 = arith.addf %1, %59 : vector<8x32xf32>
    %cst_38 = arith.constant dense<0.000000e+00> : vector<8xf32>
    %61 = vector.multi_reduction <add>, %60, %cst_38 [1] : vector<8x32xf32> to vector<8xf32>
    %62 = vector.shape_cast %61 : vector<8xf32> to vector<8x1xf32>
    %cst_39 = arith.constant 3.200000e+01 : f32
    %63 = vector.broadcast %cst_39 : f32 to vector<8x1xf32>
    %64 = arith.divf %62, %63 : vector<8x1xf32>
    %65 = vector.broadcast %64 : vector<8x1xf32> to vector<8x32xf32>
    %66 = arith.subf %60, %65 : vector<8x32xf32>
    %67 = arith.mulf %66, %66 : vector<8x32xf32>
    %cst_40 = arith.constant dense<0.000000e+00> : vector<8xf32>
    %68 = vector.multi_reduction <add>, %67, %cst_40 [1] : vector<8x32xf32> to vector<8xf32>
    %69 = vector.shape_cast %68 : vector<8xf32> to vector<8x1xf32>
    %cst_41 = arith.constant 3.200000e+01 : f32
    %70 = vector.broadcast %cst_41 : f32 to vector<8x1xf32>
    %71 = arith.divf %69, %70 : vector<8x1xf32>
    %72 = vector.broadcast %64 : vector<8x1xf32> to vector<8x32xf32>
    %73 = arith.subf %60, %72 : vector<8x32xf32>
    %cst_42 = arith.constant 9.99999974E-6 : f32
    %74 = vector.broadcast %cst_42 : f32 to vector<8x1xf32>
    %75 = arith.addf %71, %74 : vector<8x1xf32>
    %76 = math.rsqrt %75 : vector<8x1xf32>
    %77 = vector.broadcast %76 : vector<8x1xf32> to vector<8x32xf32>
    %78 = arith.mulf %73, %77 : vector<8x32xf32>
    %79 = vector.broadcast %10 : vector<1x32xf32> to vector<8x32xf32>
    %80 = arith.mulf %78, %79 : vector<8x32xf32>
    %81 = vector.broadcast %11 : vector<1x32xf32> to vector<8x32xf32>
    %82 = arith.addf %80, %81 : vector<8x32xf32>
    %c0_43 = arith.constant 0 : index
    %c0_44 = arith.constant 0 : index
    %c0_45 = arith.constant 0 : index
    %83 = vector.load %arg10[%c0_43, %c0_44, %c0_45] : memref<1x8x32xf32, #tpu.memory_space<vmem>>, vector<1x8x32xf32>
    %84 = vector.shape_cast %83 : vector<1x8x32xf32> to vector<8x32xf32>
    %85 = vector.shape_cast %82 : vector<8x32xf32> to vector<1x8x32xf32>
    tpu.vector_store %arg10[%c0_43, %c0_44, %c0_45], %85 {strides = array<i32>} : memref<1x8x32xf32, #tpu.memory_space<vmem>>, vector<1x8x32xf32>,
    return
  }
  func.func @transform_0(%arg0: i32) -> (i32, i32, i32) {
    %c0_i32 = arith.constant 0 : i32
    %c0_i32_0 = arith.constant 0 : i32
    %c0_i32_1 = arith.constant 0 : i32
    return %arg0, %c0_i32, %c0_i32_0 : i32, i32, i32
  }
  func.func @transform_1(%arg0: i32) -> (i32, i32, i32) {
    %c0_i32 = arith.constant 0 : i32
    %c0_i32_0 = arith.constant 0 : i32
    %c0_i32_1 = arith.constant 0 : i32
    return %arg0, %c0_i32, %c0_i32_0 : i32, i32, i32
  }
  func.func @transform_2(%arg0: i32) -> (i32, i32, i32) {
    %c0_i32 = arith.constant 0 : i32
    %c0_i32_0 = arith.constant 0 : i32
    %c0_i32_1 = arith.constant 0 : i32
    return %arg0, %c0_i32, %c0_i32_0 : i32, i32, i32
  }
  func.func @transform_3(%arg0: i32) -> (i32, i32) {
    %c0_i32 = arith.constant 0 : i32
    %c0_i32_0 = arith.constant 0 : i32
    %c0_i32_1 = arith.constant 0 : i32
    return %c0_i32, %c0_i32_0 : i32, i32
  }
  func.func @transform_4(%arg0: i32) -> (i32, i32) {
    %c0_i32 = arith.constant 0 : i32
    %c0_i32_0 = arith.constant 0 : i32
    %c0_i32_1 = arith.constant 0 : i32
    return %c0_i32, %c0_i32_0 : i32, i32
  }
  func.func @transform_5(%arg0: i32) -> (i32, i32) {
    %c0_i32 = arith.constant 0 : i32
    %c0_i32_0 = arith.constant 0 : i32
    %c0_i32_1 = arith.constant 0 : i32
    return %c0_i32, %c0_i32_0 : i32, i32
  }
  func.func @transform_6(%arg0: i32) -> (i32, i32, i32) {
    %c0_i32 = arith.constant 0 : i32
    %c0_i32_0 = arith.constant 0 : i32
    %c0_i32_1 = arith.constant 0 : i32
    %c0_i32_2 = arith.constant 0 : i32
    return %c0_i32, %c0_i32_0, %c0_i32_1 : i32, i32, i32
  }
  func.func @transform_7(%arg0: i32) -> (i32, i32) {
    %c0_i32 = arith.constant 0 : i32
    %c0_i32_0 = arith.constant 0 : i32
    %c0_i32_1 = arith.constant 0 : i32
    return %c0_i32, %c0_i32_0 : i32, i32
  }
  func.func @transform_8(%arg0: i32) -> (i32, i32) {
    %c0_i32 = arith.constant 0 : i32
    %c0_i32_0 = arith.constant 0 : i32
    %c0_i32_1 = arith.constant 0 : i32
    return %c0_i32, %c0_i32_0 : i32, i32
  }
  func.func @transform_9(%arg0: i32) -> (i32, i32, i32) {
    %c0_i32 = arith.constant 0 : i32
    %c0_i32_0 = arith.constant 0 : i32
    %c0_i32_1 = arith.constant 0 : i32
    return %arg0, %c0_i32, %c0_i32_0 : i32, i32, i32
  }
}

</mosaic_0001>

<llo_original>
// kernel: tpu_custom_call.1
$region0: #{tpu_custom_call.1}
  #allocation0 [shape = 'u32[]', space=smem, size = 0x4, offset = 0x4, fixed_abs, tag = 'smem constant byte address 0x4 - core index']
  #allocation1 [shape = 'u32[144,128]{1,0:T(1,128)}', space=vmem, size = 0x12000, scoped, tag = 'internal scratch']
  %s0 = inlined_call_operand.vmem [shape: f32[2,8,32], index: 0, kind: input, shape index: {}]
  %s1 = inlined_call_operand.vmem [shape: f32[2,16,32], index: 1, kind: input, shape index: {}]
  %s2 = inlined_call_operand.vmem [shape: f32[2,16,32], index: 2, kind: input, shape index: {}]
  %s3 = inlined_call_operand.vmem [shape: f32[32,32], index: 3, kind: input, shape index: {}]
  %s4 = inlined_call_operand.vmem [shape: f32[32,32], index: 4, kind: input, shape index: {}]
  %s5 = inlined_call_operand.vmem [shape: f32[32,32], index: 5, kind: input, shape index: {}]
  %s6 = inlined_call_operand.vmem [shape: f32[4,32,8], index: 6, kind: input, shape index: {}]
  %s7 = inlined_call_operand.vmem [shape: f32[32,1], index: 7, kind: input, shape index: {}]
  %s8 = inlined_call_operand.vmem [shape: f32[5,32], index: 8, kind: input, shape index: {}]
  %s9 = inlined_call_operand.hbm [shape: f32[2,8,32], index: 9, kind: output, shape index: {}]
  %s10 = sld [smem:[#allocation0]]
  $region69: #{tpu_custom_call.1} parent=0
    _
  %s12 = ssub.s32 1, %s10
  %s13 = scalar_select 0, %s12, %s10
  $region1: #{tpu_custom_call.1} parent=0
    #allocation2 [shape = 'u8[8192]{0}', space=vmem, size = 0x2000, scoped, tag = 'output window, operand 0']
    #allocation3 [shape = 's32[2]{0}', space=sflag, size = 0x8, scoped, tag = 'scoped memory for tpu_custom_call.1']
    %14 = vsyncpa [#allocation3], 0
    %s15 = scalar_lea.sflag [#allocation3], 1
    %16 = vsyncpa %s15, 0
    loop: start=0, step=1, limit=4
    $region2: #{tpu_custom_call.1} parent=1 // loop_pre_header
      _
    $region3: #{tpu_custom_call.1} parent=1 // loop_header
      %s18 = sphi 0, %s22
      %p19 = scmp.ge.s32.totalorder %s18, 4
      %s28 = sphi 0, %s30
      %s31 = sphi 0, %s28
      %s32 = sphi 0, %s31
      %s48 = sphi 0, %s32
      %s54 = sphi 0, %s56
      %s57 = sphi 0, %s54
      %s58 = sphi 0, %s57
      %s74 = sphi 0, %s58
      %s80 = sphi 0, %s82
      %s83 = sphi 0, %s80
      %s84 = sphi 0, %s83
      %s100 = sphi 0, %s84
      %s104 = sphi 0, %s104
      %s106 = sphi 0, %s104
      %s107 = sphi 0, %s106
      %s121 = sphi 0, %s107
      %s125 = sphi 0, %s125
      %s127 = sphi 0, %s125
      %s128 = sphi 0, %s127
      %s142 = sphi 0, %s128
      %s146 = sphi 0, %s146
      %s148 = sphi 0, %s146
      %s149 = sphi 0, %s148
      %s163 = sphi 0, %s149
      %s167 = sphi 0, %s167
      %s169 = sphi 0, %s167
      %s170 = sphi 0, %s169
      %s184 = sphi 0, %s170
      %s188 = sphi 0, %s188
      %s190 = sphi 0, %s188
      %s191 = sphi 0, %s190
      %s205 = sphi 0, %s191
      %s209 = sphi 0, %s209
      %s211 = sphi 0, %s209
      %s212 = sphi 0, %s211
      %s226 = sphi 0, %s212
      %s232 = sphi 0, %s234
      %s235 = sphi 0, %s232
      %s236 = sphi 0, %s235
      %s252 = sphi 0, %s236
    $region4: #{tpu_custom_call.1} parent=1 // loop_header_branch
      %21 = sbr.rel (%p19) target = $region8
    $region5: #{tpu_custom_call.1} parent=1 // loop_body
      %s23 = ssub.s32 %s18, 1
      %s24 = ssub.s32 %s18, 2
      %s25 = sadd.s32 %s18, 1
      %s26 = ssub.s32 %s18, %s25
      %p27 = scmp.eq.s32.totalorder %s26, 0
      %s29 = sadd.s32 %s28, 1
      %s30 = scalar_select %p27, %s28, %s29
      %p33 = pneg %p27
      %p34 = scmp.eq.s32.totalorder %s18, 1
      %p35 = por %p33, %p34
      %p36 = scmp.ne.s32.totalorder %s28, %s31
      %p37 = scmp.eq.s32.totalorder %s18, 0
      %p38 = por %p36, %p37
      %p39 = scmp.ne.s32.totalorder %s28, %s31
      %p40 = scmp.eq.s32.totalorder %s23, 1
      %p41 = por %p39, %p40
      %p42 = scmp.ne.s32.totalorder %s31, %s32
      %p43 = scmp.eq.s32.totalorder %s23, 0
      %p44 = por %p42, %p43
      %p45 = scmp.ne.s32.totalorder %s31, %s32
      %p46 = scmp.eq.s32.totalorder %s24, 1
      %p47 = por %p45, %p46
      %p49 = scmp.ne.s32.totalorder %s32, %s48
      %p50 = scmp.eq.s32.totalorder %s24, 0
      %p51 = por %p49, %p50
      %s52 = ssub.s32 %s18, %s25
      %p53 = scmp.eq.s32.totalorder %s52, 0
      %s55 = sadd.s32 %s54, 1
      %s56 = scalar_select %p53, %s54, %s55
      %p59 = pneg %p53
      %p60 = scmp.eq.s32.totalorder %s18, 1
      %p61 = por %p59, %p60
      %p62 = scmp.ne.s32.totalorder %s54, %s57
      %p63 = scmp.eq.s32.totalorder %s18, 0
      %p64 = por %p62, %p63
      %p65 = scmp.ne.s32.totalorder %s54, %s57
      %p66 = scmp.eq.s32.totalorder %s23, 1
      %p67 = por %p65, %p66
      %p68 = scmp.ne.s32.totalorder %s57, %s58
      %p69 = scmp.eq.s32.totalorder %s23, 0
      %p70 = por %p68, %p69
      %p71 = scmp.ne.s32.totalorder %s57, %s58
      %p72 = scmp.eq.s32.totalorder %s24, 1
      %p73 = por %p71, %p72
      %p75 = scmp.ne.s32.totalorder %s58, %s74
      %p76 = scmp.eq.s32.totalorder %s24, 0
      %p77 = por %p75, %p76
      %s78 = ssub.s32 %s18, %s25
      %p79 = scmp.eq.s32.totalorder %s78, 0
      %s81 = sadd.s32 %s80, 1
      %s82 = scalar_select %p79, %s80, %s81
      %p85 = pneg %p79
      %p86 = scmp.eq.s32.totalorder %s18, 1
      %p87 = por %p85, %p86
      %p88 = scmp.ne.s32.totalorder %s80, %s83
      %p89 = scmp.eq.s32.totalorder %s18, 0
      %p90 = por %p88, %p89
      %p91 = scmp.ne.s32.totalorder %s80, %s83
      %p92 = scmp.eq.s32.totalorder %s23, 1
      %p93 = por %p91, %p92
      %p94 = scmp.ne.s32.totalorder %s83, %s84
      %p95 = scmp.eq.s32.totalorder %s23, 0
      %p96 = por %p94, %p95
      %p97 = scmp.ne.s32.totalorder %s83, %s84
      %p98 = scmp.eq.s32.totalorder %s24, 1
      %p99 = por %p97, %p98
      %p101 = scmp.ne.s32.totalorder %s84, %s100
      %p102 = scmp.eq.s32.totalorder %s24, 0
      %p103 = por %p101, %p102
      %s105 = sadd.s32 %s104, 1
      %p108 = scmp.eq.s32.totalorder %s18, 1
      %p109 = scmp.ne.s32.totalorder %s104, %s106
      %p110 = scmp.eq.s32.totalorder %s18, 0
      %p111 = por %p109, %p110
      %p112 = scmp.ne.s32.totalorder %s104, %s106
      %p113 = scmp.eq.s32.totalorder %s23, 1
      %p114 = por %p112, %p113
      %p115 = scmp.ne.s32.totalorder %s106, %s107
      %p116 = scmp.eq.s32.totalorder %s23, 0
      %p117 = por %p115, %p116
      %p118 = scmp.ne.s32.totalorder %s106, %s107
      %p119 = scmp.eq.s32.totalorder %s24, 1
      %p120 = por %p118, %p119
      %p122 = scmp.ne.s32.totalorder %s107, %s121
      %p123 = scmp.eq.s32.totalorder %s24, 0
      %p124 = por %p122, %p123
      %s126 = sadd.s32 %s125, 1
      %p129 = scmp.eq.s32.totalorder %s18, 1
      %p130 = scmp.ne.s32.totalorder %s125, %s127
      %p131 = scmp.eq.s32.totalorder %s18, 0
      %p132 = por %p130, %p131
      %p133 = scmp.ne.s32.totalorder %s125, %s127
      %p134 = scmp.eq.s32.totalorder %s23, 1
      %p135 = por %p133, %p134
      %p136 = scmp.ne.s32.totalorder %s127, %s128
      %p137 = scmp.eq.s32.totalorder %s23, 0
      %p138 = por %p136, %p137
      %p139 = scmp.ne.s32.totalorder %s127, %s128
      %p140 = scmp.eq.s32.totalorder %s24, 1
      %p141 = por %p139, %p140
      %p143 = scmp.ne.s32.totalorder %s128, %s142
      %p144 = scmp.eq.s32.totalorder %s24, 0
      %p145 = por %p143, %p144
      %s147 = sadd.s32 %s146, 1
      %p150 = scmp.eq.s32.totalorder %s18, 1
      %p151 = scmp.ne.s32.totalorder %s146, %s148
      %p152 = scmp.eq.s32.totalorder %s18, 0
      %p153 = por %p151, %p152
      %p154 = scmp.ne.s32.totalorder %s146, %s148
      %p155 = scmp.eq.s32.totalorder %s23, 1
      %p156 = por %p154, %p155
      %p157 = scmp.ne.s32.totalorder %s148, %s149
      %p158 = scmp.eq.s32.totalorder %s23, 0
      %p159 = por %p157, %p158
      %p160 = scmp.ne.s32.totalorder %s148, %s149
      %p161 = scmp.eq.s32.totalorder %s24, 1
      %p162 = por %p160, %p161
      %p164 = scmp.ne.s32.totalorder %s149, %s163
      %p165 = scmp.eq.s32.totalorder %s24, 0
      %p166 = por %p164, %p165
      %s168 = sadd.s32 %s167, 1
      %p171 = scmp.eq.s32.totalorder %s18, 1
      %p172 = scmp.ne.s32.totalorder %s167, %s169
      %p173 = scmp.eq.s32.totalorder %s18, 0
      %p174 = por %p172, %p173
      %p175 = scmp.ne.s32.totalorder %s167, %s169
      %p176 = scmp.eq.s32.totalorder %s23, 1
      %p177 = por %p175, %p176
      %p178 = scmp.ne.s32.totalorder %s169, %s170
      %p179 = scmp.eq.s32.totalorder %s23, 0
      %p180 = por %p178, %p179
      %p181 = scmp.ne.s32.totalorder %s169, %s170
      %p182 = scmp.eq.s32.totalorder %s24, 1
      %p183 = por %p181, %p182
      %p185 = scmp.ne.s32.totalorder %s170, %s184
      %p186 = scmp.eq.s32.totalorder %s24, 0
      %p187 = por %p185, %p186
      %s189 = sadd.s32 %s188, 1
      %p192 = scmp.eq.s32.totalorder %s18, 1
      %p193 = scmp.ne.s32.totalorder %s188, %s190
      %p194 = scmp.eq.s32.totalorder %s18, 0
      %p195 = por %p193, %p194
      %p196 = scmp.ne.s32.totalorder %s188, %s190
      %p197 = scmp.eq.s32.totalorder %s23, 1
      %p198 = por %p196, %p197
      %p199 = scmp.ne.s32.totalorder %s190, %s191
      %p200 = scmp.eq.s32.totalorder %s23, 0
      %p201 = por %p199, %p200
      %p202 = scmp.ne.s32.totalorder %s190, %s191
      %p203 = scmp.eq.s32.totalorder %s24, 1
      %p204 = por %p202, %p203
      %p206 = scmp.ne.s32.totalorder %s191, %s205
      %p207 = scmp.eq.s32.totalorder %s24, 0
      %p208 = por %p206, %p207
      %s210 = sadd.s32 %s209, 1
      %p213 = scmp.eq.s32.totalorder %s18, 1
      %p214 = scmp.ne.s32.totalorder %s209, %s211
      %p215 = scmp.eq.s32.totalorder %s18, 0
      %p216 = por %p214, %p215
      %p217 = scmp.ne.s32.totalorder %s209, %s211
      %p218 = scmp.eq.s32.totalorder %s23, 1
      %p219 = por %p217, %p218
      %p220 = scmp.ne.s32.totalorder %s211, %s212
      %p221 = scmp.eq.s32.totalorder %s23, 0
      %p222 = por %p220, %p221
      %p223 = scmp.ne.s32.totalorder %s211, %s212
      %p224 = scmp.eq.s32.totalorder %s24, 1
      %p225 = por %p223, %p224
      %p227 = scmp.ne.s32.totalorder %s212, %s226
      %p228 = scmp.eq.s32.totalorder %s24, 0
      %p229 = por %p227, %p228
      %s230 = ssub.s32 %s18, %s25
      %p231 = scmp.eq.s32.totalorder %s230, 0
      %s233 = sadd.s32 %s232, 1
      %s234 = scalar_select %p231, %s232, %s233
      %p237 = pneg %p231
      %p238 = scmp.eq.s32.totalorder %s18, 1
      %p239 = por %p237, %p238
      %p240 = scmp.ne.s32.totalorder %s232, %s235
      %p241 = scmp.eq.s32.totalorder %s18, 0
      %p242 = por %p240, %p241
      %p243 = scmp.ne.s32.totalorder %s232, %s235
      %p244 = scmp.eq.s32.totalorder %s23, 1
      %p245 = por %p243, %p244
      %p246 = scmp.ne.s32.totalorder %s235, %s236
      %p247 = scmp.eq.s32.totalorder %s23, 0
      %p248 = por %p246, %p247
      %p249 = scmp.ne.s32.totalorder %s235, %s236
      %p250 = scmp.eq.s32.totalorder %s24, 1
      %p251 = por %p249, %p250
      %p253 = scmp.ne.s32.totalorder %s236, %s252
      %p254 = scmp.eq.s32.totalorder %s24, 0
      %p255 = por %p253, %p254
      %p256 = scmp.le.s32.totalorder 1, %s18
      %p257 = scmp.lt.s32.totalorder %s18, 3
      %p258 = pnand %p256, %p257
      %p259 = pneg %p258
      // Predicated region
      $region9: #{tpu_custom_call.1} parent=5 // pred_check
        _
      $region10: #{tpu_custom_call.1} parent=5 // pred_check_branch
        %261 = sbr.rel (%p258) target = $region12
      $region11: #{tpu_custom_call.1} parent=5 // pred_region
        %s262 = ssub.s32 %s18, 1
        // Predicated region
        $region13: #{tpu_custom_call.1} parent=11 // pred_check
          %p263 = pneg %p117
        $region14: #{tpu_custom_call.1} parent=11 // pred_check_branch
          %265 = sbr.rel (%p263) target = $region16
        $region15: #{tpu_custom_call.1} parent=11 // pred_region
          _
        $region16: #{tpu_custom_call.1} parent=11 // pred_fallthru
          _
        // Predicated region
        $region17: #{tpu_custom_call.1} parent=11 // pred_check
          %p266 = pneg %p138
        $region18: #{tpu_custom_call.1} parent=11 // pred_check_branch
          %268 = sbr.rel (%p266) target = $region20
        $region19: #{tpu_custom_call.1} parent=11 // pred_region
          _
        $region20: #{tpu_custom_call.1} parent=11 // pred_fallthru
          _
        // Predicated region
        $region21: #{tpu_custom_call.1} parent=11 // pred_check
          %p269 = pneg %p159
        $region22: #{tpu_custom_call.1} parent=11 // pred_check_branch
          %271 = sbr.rel (%p269) target = $region24
        $region23: #{tpu_custom_call.1} parent=11 // pred_region
          _
        $region24: #{tpu_custom_call.1} parent=11 // pred_fallthru
          _
        // Predicated region
        $region25: #{tpu_custom_call.1} parent=11 // pred_check
          %p272 = pneg %p180
        $region26: #{tpu_custom_call.1} parent=11 // pred_check_branch
          %274 = sbr.rel (%p272) target = $region28
        $region27: #{tpu_custom_call.1} parent=11 // pred_region
          _
        $region28: #{tpu_custom_call.1} parent=11 // pred_fallthru
          _
        // Predicated region
        $region29: #{tpu_custom_call.1} parent=11 // pred_check
          %p275 = pneg %p201
        $region30: #{tpu_custom_call.1} parent=11 // pred_check_branch
          %277 = sbr.rel (%p275) target = $region32
        $region31: #{tpu_custom_call.1} parent=11 // pred_region
          _
        $region32: #{tpu_custom_call.1} parent=11 // pred_fallthru
          _
        // Predicated region
        $region33: #{tpu_custom_call.1} parent=11 // pred_check
          %p278 = pneg %p222
        $region34: #{tpu_custom_call.1} parent=11 // pred_check_branch
          %280 = sbr.rel (%p278) target = $region36
        $region35: #{tpu_custom_call.1} parent=11 // pred_region
          _
        $region36: #{tpu_custom_call.1} parent=11 // pred_fallthru
          _
      $region12: #{tpu_custom_call.1} parent=5 // pred_fallthru
        _
      %p281 = scmp.lt.s32.totalorder %s18, 2
      // Predicated region
      $region37: #{tpu_custom_call.1} parent=5 // pred_check
        %p282 = pneg %p281
      $region38: #{tpu_custom_call.1} parent=5 // pred_check_branch
        %284 = sbr.rel (%p282) target = $region40
      $region39: #{tpu_custom_call.1} parent=5 // pred_region
        // Predicated region
        $region41: #{tpu_custom_call.1} parent=39 // pred_check
          %p285 = pneg %p38
        $region42: #{tpu_custom_call.1} parent=39 // pred_check_branch
          %287 = sbr.rel (%p285) target = $region44
        $region43: #{tpu_custom_call.1} parent=39 // pred_region
          %p288 = scmp.lt.s32.totalorder %s18, 1
          %s289 = scalar_select %p288, %s18, 1
          %s290 = smul.addr %s289, 8
          %s291 = scalar_lea.vmem %s0, %s290
        $region44: #{tpu_custom_call.1} parent=39 // pred_fallthru
          _
        // Predicated region
        $region45: #{tpu_custom_call.1} parent=39 // pred_check
          %p292 = pneg %p64
        $region46: #{tpu_custom_call.1} parent=39 // pred_check_branch
          %294 = sbr.rel (%p292) target = $region48
        $region47: #{tpu_custom_call.1} parent=39 // pred_region
          %p295 = scmp.lt.s32.totalorder %s18, 1
          %s296 = scalar_select %p295, %s18, 1
          %s297 = smul.addr %s296, 2
          %s298 = smul.addr %s297, 8
          %s299 = scalar_lea.vmem %s1, %s298
        $region48: #{tpu_custom_call.1} parent=39 // pred_fallthru
          _
        // Predicated region
        $region49: #{tpu_custom_call.1} parent=39 // pred_check
          %p300 = pneg %p90
        $region50: #{tpu_custom_call.1} parent=39 // pred_check_branch
          %302 = sbr.rel (%p300) target = $region52
        $region51: #{tpu_custom_call.1} parent=39 // pred_region
          %p303 = scmp.lt.s32.totalorder %s18, 1
          %s304 = scalar_select %p303, %s18, 1
          %s305 = smul.addr %s304, 2
          %s306 = smul.addr %s305, 8
          %s307 = scalar_lea.vmem %s2, %s306
        $region52: #{tpu_custom_call.1} parent=39 // pred_fallthru
          _
      $region40: #{tpu_custom_call.1} parent=5 // pred_fallthru
        _
      %p308 = scmp.le.s32.totalorder 1, %s18
      %p309 = scmp.lt.s32.totalorder %s18, 3
      %p310 = pnand %p308, %p309
      %p311 = pneg %p310
      // Predicated region
      $region53: #{tpu_custom_call.1} parent=5 // pred_check
        _
      $region54: #{tpu_custom_call.1} parent=5 // pred_check_branch
        %313 = sbr.rel (%p310) target = $region56
      $region55: #{tpu_custom_call.1} parent=5 // pred_region
        %s314 = ssub.s32 %s18, 1
        %p315 = scmp.lt.s32.totalorder %s23, 1
        %s316 = scalar_select %p315, %s23, 1
        %s317 = smul.addr %s316, 8
        %s318 = scalar_lea.vmem %s0, %s317
        %p319 = pneg %p44
        %p320 = pneg %p41
        %p321 = scmp.lt.s32.totalorder %s23, 1
        %s322 = scalar_select %p321, %s23, 1
        %s323 = smul.addr %s322, 2
        %s324 = smul.addr %s323, 8
        %s325 = scalar_lea.vmem %s1, %s324
        %p326 = pneg %p70
        %p327 = pneg %p67
        %p328 = scmp.lt.s32.totalorder %s23, 1
        %s329 = scalar_select %p328, %s23, 1
        %s330 = smul.addr %s329, 2
        %s331 = smul.addr %s330, 8
        %s332 = scalar_lea.vmem %s2, %s331
        %p333 = pneg %p96
        %p334 = pneg %p93
        %p335 = pneg %p117
        %p336 = pneg %p114
        %p337 = pneg %p138
        %p338 = pneg %p135
        %p339 = pneg %p159
        %p340 = pneg %p156
        %p341 = pneg %p180
        %p342 = pneg %p177
        %p343 = pneg %p201
        %p344 = pneg %p198
        %p345 = pneg %p222
        %p346 = pneg %p219
        %p347 = pneg %p248
        %p348 = pneg %p245
        %s349 = sand.u32 %s235, 1
        %s350 = scalar_lea.sflag [#allocation3], %s349
        %s351 = sand.u32 %s235, 1
        %s352 = smul.addr %s351, 8
        %s353 = scalar_lea.vmem [#allocation2], %s352
        %p354 = scmp.lt.s32.totalorder %s23, 1
        %s355 = scalar_select %p354, %s23, 1
        %s356 = smul.addr %s355, 8
        %s357 = scalar_lea.vmem %s0, %s356
        %p358 = scmp.lt.s32.totalorder %s23, 1
        %s359 = scalar_select %p358, %s23, 1
        %s360 = smul.addr %s359, 2
        %s361 = smul.addr %s360, 8
        %s362 = scalar_lea.vmem %s1, %s361
        %p363 = scmp.lt.s32.totalorder %s23, 1
        %s364 = scalar_select %p363, %s23, 1
        %s365 = smul.addr %s364, 2
        %s366 = smul.addr %s365, 8
        %s367 = scalar_lea.vmem %s2, %s366
        %v368 = vld [vmem:[%s357] sm:$0xff]
        %v369 = vld [vmem:[%s362] sm:$0xff]
        %v370 = vld [vmem:[%s362 + $0x8] sm:$0xff]
        %v371 = vld [vmem:[%s367] sm:$0xff]
        %v372 = vld [vmem:[%s367 + $0x8] sm:$0xff]
        %v373 = vld [vmem:[%s8] sm:$0x1f]
        %v374 = vld [vmem:[%s7] sm:$0xff]
        %v375 = vld [vmem:[%s7 + $0x8] sm:$0xff]
        %v376 = vld [vmem:[%s7 + $0x10] sm:$0xff]
        %v377 = vld [vmem:[%s7 + $0x18] sm:$0xff]
        %v378 = vld [vmem:[%s3] sm:$0xff]
        %v379 = vld [vmem:[%s3 + $0x8] sm:$0xff]
        %v380 = vld [vmem:[%s3 + $0x10] sm:$0xff]
        %v381 = vld [vmem:[%s3 + $0x18] sm:$0xff]
        %v382 = vlaneseq
        %v383 = vshrl.u32 %v382, 7
        %v384 = vsub.s32 0, %v383
        %v385 = vrot.slane %v373, %v384
        %vm386 = vcmask 261120
        %v388 = vsel %vm386, %v368, 0
        %v391 = vsel %vm386, %v378, 0
        %v394 = vsel %vm386, %v379, 0
        %v397 = vsel %vm386, %v380, 0
        %v400 = vsel %vm386, %v381, 0
        %402 = vmatprep.subr.mxu0 0.0
        %403 = vmatpush1.xpose.msra.mxu0 %v391
        %404 = vmatprep.subr.mxu0 0.0
        %405 = vmatpush1.xpose.msra.mxu0 %v394
        %406 = vmatprep.subr.mxu0 0.0
        %407 = vmatpush1.xpose.msra.mxu0 %v397
        %408 = vmatprep.subr.mxu0 0.0
        %409 = vmatpush1.xpose.msra.mxu0 %v400
        %410 = vmatprep.subr.mxu0 0.0
        %411 = vmatpush1.xpose.msra.mxu0 0.0
        %412 = vmatprep.subr.mxu0 0.0
        %413 = vmatpush1.xpose.msra.mxu0 0.0
        %414 = vmatprep.subr.mxu0 0.0
        %415 = vmatpush1.xpose.msra.mxu0 0.0
        %416 = vmatprep.subr.mxu0 0.0
        %417 = vmatpush1.xpose.msra.mxu0 0.0
        %418 = vmatprep.subr.mxu0 0.0
        %419 = vmatpush1.xpose.msra.mxu0 0.0
        %420 = vmatprep.subr.mxu0 0.0
        %421 = vmatpush1.xpose.msra.mxu0 0.0
        %422 = vmatprep.subr.mxu0 0.0
        %423 = vmatpush1.xpose.msra.mxu0 0.0
        %424 = vmatprep.subr.mxu0 0.0
        %425 = vmatpush1.xpose.msra.mxu0 0.0
        %426 = vmatprep.subr.mxu0 0.0
        %427 = vmatpush1.xpose.msra.mxu0 0.0
        %428 = vmatprep.subr.mxu0 0.0
        %429 = vmatpush1.xpose.msra.mxu0 0.0
        %430 = vmatprep.subr.mxu0 0.0
        %431 = vmatpush1.xpose.msra.mxu0 0.0
        %432 = vmatprep.subr.mxu0 0.0
        %433 = vmatpush1.xpose.msra.mxu0 0.0
        %434 = vmatprep.subr.mxu0 0.0
        %435 = vmatpush1.xpose.msra.mxu0 0.0
        %436 = vmatprep.subr.mxu0 0.0
        %437 = vmatpush1.xpose.msra.mxu0 0.0
        %438 = vmatprep.subr.mxu0 0.0
        %439 = vmatpush1.xpose.msra.mxu0 0.0
        %440 = vmatprep.subr.mxu0 0.0
        %441 = vmatpush1.xpose.msra.mxu0 0.0
        %442 = vmatprep.subr.mxu0 0.0
        %443 = vmatpush1.xpose.msra.mxu0 0.0
        %444 = vmatprep.subr.mxu0 0.0
        %445 = vmatpush1.xpose.msra.mxu0 0.0
        %446 = vmatprep.subr.mxu0 0.0
        %447 = vmatpush1.xpose.msra.mxu0 0.0
        %448 = vmatprep.subr.mxu0 0.0
        %449 = vmatpush1.xpose.msra.mxu0 0.0
        %450 = vmatprep.subr.mxu0 0.0
        %451 = vmatpush1.xpose.msra.mxu0 0.0
        %452 = vmatprep.subr.mxu0 0.0
        %453 = vmatpush1.xpose.msra.mxu0 0.0
        %454 = vmatprep.subr.mxu0 0.0
        %455 = vmatpush1.xpose.msra.mxu0 0.0
        %456 = vmatprep.subr.mxu0 0.0
        %457 = vmatpush1.xpose.msra.mxu0 0.0
        %458 = vmatprep.subr.mxu0 0.0
        %459 = vmatpush1.xpose.msra.mxu0 0.0
        %460 = vmatprep.subr.mxu0 0.0
        %461 = vmatpush1.xpose.msra.mxu0 0.0
        %462 = vmatprep.subr.mxu0 0.0
        %463 = vmatpush1.xpose.msra.mxu0 0.0
        %464 = vmatprep.subr.mxu0 0.0
        %465 = vmatpush1.xpose.msra.mxu0 0.0
        %466 = vmatprep.mubr.f32.mxu0 0.0
        %467 = vmatmul.mubr.f32.gmra.mrb[0].mxu0 %v388
        %v468 = vpop.f32.mrb[0].mxu0
        %v469 = vadd.f32 %v385, %v468
        %v470 = vpop.f32.mrb[0].mxu0
        %471 = vdwg.mxu0
        %v472 = vld [vmem:[%s4] sm:$0xff]
        %v473 = vld [vmem:[%s4 + $0x8] sm:$0xff]
        %v474 = vld [vmem:[%s4 + $0x10] sm:$0xff]
        %v475 = vld [vmem:[%s4 + $0x18] sm:$0xff]
        %v476 = vlaneseq
        %v477 = vshrl.u32 %v476, 7
        %v478 = vsub.s32 1, %v477
        %v479 = vrot.slane %v373, %v478
        %v481 = vsel %vm386, %v369, 0
        %v484 = vsel %vm386, %v370, 0
        %v487 = vsel %vm386, %v472, 0
        %v490 = vsel %vm386, %v473, 0
        %v493 = vsel %vm386, %v474, 0
        %v496 = vsel %vm386, %v475, 0
        %498 = vmatprep.subr.mxu0 0.0
        %499 = vmatpush1.xpose.msra.mxu0 %v487
        %500 = vmatprep.subr.mxu0 0.0
        %501 = vmatpush1.xpose.msra.mxu0 %v490
        %502 = vmatprep.subr.mxu0 0.0
        %503 = vmatpush1.xpose.msra.mxu0 %v493
        %504 = vmatprep.subr.mxu0 0.0
        %505 = vmatpush1.xpose.msra.mxu0 %v496
        %506 = vmatprep.subr.mxu0 0.0
        %507 = vmatpush1.xpose.msra.mxu0 0.0
        %508 = vmatprep.subr.mxu0 0.0
        %509 = vmatpush1.xpose.msra.mxu0 0.0
        %510 = vmatprep.subr.mxu0 0.0
        %511 = vmatpush1.xpose.msra.mxu0 0.0
        %512 = vmatprep.subr.mxu0 0.0
        %513 = vmatpush1.xpose.msra.mxu0 0.0
        %514 = vmatprep.subr.mxu0 0.0
        %515 = vmatpush1.xpose.msra.mxu0 0.0
        %516 = vmatprep.subr.mxu0 0.0
        %517 = vmatpush1.xpose.msra.mxu0 0.0
        %518 = vmatprep.subr.mxu0 0.0
        %519 = vmatpush1.xpose.msra.mxu0 0.0
        %520 = vmatprep.subr.mxu0 0.0
        %521 = vmatpush1.xpose.msra.mxu0 0.0
        %522 = vmatprep.subr.mxu0 0.0
        %523 = vmatpush1.xpose.msra.mxu0 0.0
        %524 = vmatprep.subr.mxu0 0.0
        %525 = vmatpush1.xpose.msra.mxu0 0.0
        %526 = vmatprep.subr.mxu0 0.0
        %527 = vmatpush1.xpose.msra.mxu0 0.0
        %528 = vmatprep.subr.mxu0 0.0
        %529 = vmatpush1.xpose.msra.mxu0 0.0
        %530 = vmatprep.subr.mxu0 0.0
        %531 = vmatpush1.xpose.msra.mxu0 0.0
        %532 = vmatprep.subr.mxu0 0.0
        %533 = vmatpush1.xpose.msra.mxu0 0.0
        %534 = vmatprep.subr.mxu0 0.0
        %535 = vmatpush1.xpose.msra.mxu0 0.0
        %536 = vmatprep.subr.mxu0 0.0
        %537 = vmatpush1.xpose.msra.mxu0 0.0
        %538 = vmatprep.subr.mxu0 0.0
        %539 = vmatpush1.xpose.msra.mxu0 0.0
        %540 = vmatprep.subr.mxu0 0.0
        %541 = vmatpush1.xpose.msra.mxu0 0.0
        %542 = vmatprep.subr.mxu0 0.0
        %543 = vmatpush1.xpose.msra.mxu0 0.0
        %544 = vmatprep.subr.mxu0 0.0
        %545 = vmatpush1.xpose.msra.mxu0 0.0
        %546 = vmatprep.subr.mxu0 0.0
        %547 = vmatpush1.xpose.msra.mxu0 0.0
        %548 = vmatprep.subr.mxu0 0.0
        %549 = vmatpush1.xpose.msra.mxu0 0.0
        %550 = vmatprep.subr.mxu0 0.0
        %551 = vmatpush1.xpose.msra.mxu0 0.0
        %552 = vmatprep.subr.mxu0 0.0
        %553 = vmatpush1.xpose.msra.mxu0 0.0
        %554 = vmatprep.subr.mxu0 0.0
        %555 = vmatpush1.xpose.msra.mxu0 0.0
        %556 = vmatprep.subr.mxu0 0.0
        %557 = vmatpush1.xpose.msra.mxu0 0.0
        %558 = vmatprep.subr.mxu0 0.0
        %559 = vmatpush1.xpose.msra.mxu0 0.0
        %560 = vmatprep.subr.mxu0 0.0
        %561 = vmatpush1.xpose.msra.mxu0 0.0
        %562 = vmatprep.mubr.f32.mxu0 0.0
        %563 = vmatmul.mubr.f32.gmra.mrb[0].mxu0 %v481
        %v564 = vpop.f32.mrb[0].mxu0
        %v565 = vadd.f32 %v479, %v564
        %v566 = vpop.f32.mrb[0].mxu0
        %567 = vmatprep.mubr.f32.mxu0 0.0
        %568 = vmatmul.mubr.f32.gmra.mrb[0].mxu0 %v484
        %v569 = vpop.f32.mrb[0].mxu0
        %v570 = vadd.f32 %v479, %v569
        %v571 = vpop.f32.mrb[0].mxu0
        %572 = vdwg.mxu0
        %v573 = vld [vmem:[%s5] sm:$0xff]
        %v574 = vld [vmem:[%s5 + $0x8] sm:$0xff]
        %v575 = vld [vmem:[%s5 + $0x10] sm:$0xff]
        %v576 = vld [vmem:[%s5 + $0x18] sm:$0xff]
        %578 = vset.pattern.permute.xlu0 0
        %579 = vperm.xlu0 %578, %v374
        %v580 = vpop.permute.xlu0 %579
        %583 = vset.pattern.permute.xlu0 0
        %584 = vperm.xlu0 %583, %v375
        %v585 = vpop.permute.xlu0 %584
        %588 = vset.pattern.permute.xlu0 0
        %589 = vperm.xlu0 %588, %v376
        %v590 = vpop.permute.xlu0 %589
        %593 = vset.pattern.permute.xlu0 0
        %594 = vperm.xlu0 %593, %v377
        %v595 = vpop.permute.xlu0 %594
        %v598 = vsel %vm386, %v573, 0
        %v601 = vsel %vm386, %v574, 0
        %v604 = vsel %vm386, %v575, 0
        %v607 = vsel %vm386, %v576, 0
        %v610 = vsel %vm386, %v371, 0
        %v613 = vsel %vm386, %v372, 0
        %615 = vmatprep.subr.mxu0 0.0
        %616 = vmatpush1.xpose.msra.mxu0 %v610
        %617 = vmatprep.subr.mxu0 0.0
        %618 = vmatpush1.xpose.msra.mxu0 %v613
        %619 = vmatprep.subr.mxu0 0.0
        %620 = vmatpush1.xpose.msra.mxu0 0.0
        %621 = vmatprep.subr.mxu0 0.0
        %622 = vmatpush1.xpose.msra.mxu0 0.0
        %623 = vmatprep.subr.mxu0 0.0
        %624 = vmatpush1.xpose.msra.mxu0 0.0
        %625 = vmatprep.subr.mxu0 0.0
        %626 = vmatpush1.xpose.msra.mxu0 0.0
        %627 = vmatprep.subr.mxu0 0.0
        %628 = vmatpush1.xpose.msra.mxu0 0.0
        %629 = vmatprep.subr.mxu0 0.0
        %630 = vmatpush1.xpose.msra.mxu0 0.0
        %631 = vmatprep.subr.mxu0 0.0
        %632 = vmatpush1.xpose.msra.mxu0 0.0
        %633 = vmatprep.subr.mxu0 0.0
        %634 = vmatpush1.xpose.msra.mxu0 0.0
        %635 = vmatprep.subr.mxu0 0.0
        %636 = vmatpush1.xpose.msra.mxu0 0.0
        %637 = vmatprep.subr.mxu0 0.0
        %638 = vmatpush1.xpose.msra.mxu0 0.0
        %639 = vmatprep.subr.mxu0 0.0
        %640 = vmatpush1.xpose.msra.mxu0 0.0
        %641 = vmatprep.subr.mxu0 0.0
        %642 = vmatpush1.xpose.msra.mxu0 0.0
        %643 = vmatprep.subr.mxu0 0.0
        %644 = vmatpush1.xpose.msra.mxu0 0.0
        %645 = vmatprep.subr.mxu0 0.0
        %646 = vmatpush1.xpose.msra.mxu0 0.0
        %647 = vmatprep.subr.mxu0 0.0
        %648 = vmatpush1.xpose.msra.mxu0 0.0
        %649 = vmatprep.subr.mxu0 0.0
        %650 = vmatpush1.xpose.msra.mxu0 0.0
        %651 = vmatprep.subr.mxu0 0.0
        %652 = vmatpush1.xpose.msra.mxu0 0.0
        %653 = vmatprep.subr.mxu0 0.0
        %654 = vmatpush1.xpose.msra.mxu0 0.0
        %655 = vmatprep.subr.mxu0 0.0
        %656 = vmatpush1.xpose.msra.mxu0 0.0
        %657 = vmatprep.subr.mxu0 0.0
        %658 = vmatpush1.xpose.msra.mxu0 0.0
        %659 = vmatprep.subr.mxu0 0.0
        %660 = vmatpush1.xpose.msra.mxu0 0.0
        %661 = vmatprep.subr.mxu0 0.0
        %662 = vmatpush1.xpose.msra.mxu0 0.0
        %663 = vmatprep.subr.mxu0 0.0
        %664 = vmatpush1.xpose.msra.mxu0 0.0
        %665 = vmatprep.subr.mxu0 0.0
        %666 = vmatpush1.xpose.msra.mxu0 0.0
        %667 = vmatprep.subr.mxu0 0.0
        %668 = vmatpush1.xpose.msra.mxu0 0.0
        %669 = vmatprep.subr.mxu0 0.0
        %670 = vmatpush1.xpose.msra.mxu0 0.0
        %671 = vmatprep.subr.mxu0 0.0
        %672 = vmatpush1.xpose.msra.mxu0 0.0
        %673 = vmatprep.subr.mxu0 0.0
        %674 = vmatpush1.xpose.msra.mxu0 0.0
        %675 = vmatprep.subr.mxu0 0.0
        %676 = vmatpush1.xpose.msra.mxu0 0.0
        %677 = vmatprep.subr.mxu0 0.0
        %678 = vmatpush1.xpose.msra.mxu0 0.0
        %679 = vmatprep.mubr.f32.mxu0 0.0
        %680 = vmatmul.mubr.f32.gmra.mrb[0].mxu0 %v598
        %v681 = vpop.f32.mrb[0].mxu0
        %v682 = vadd.f32 %v580, %v681
        %v683 = vpop.f32.mrb[0].mxu0
        %684 = vmatprep.mubr.f32.mxu0 0.0
        %685 = vmatmul.mubr.f32.gmra.mrb[0].mxu0 %v601
        %v686 = vpop.f32.mrb[0].mxu0
        %v687 = vadd.f32 %v585, %v686
        %v688 = vpop.f32.mrb[0].mxu0
        %689 = vmatprep.mubr.f32.mxu0 0.0
        %690 = vmatmul.mubr.f32.gmra.mrb[0].mxu0 %v604
        %v691 = vpop.f32.mrb[0].mxu0
        %v692 = vadd.f32 %v590, %v691
        %v693 = vpop.f32.mrb[0].mxu0
        %694 = vmatprep.mubr.f32.mxu0 0.0
        %695 = vmatmul.mubr.f32.gmra.mrb[0].mxu0 %v607
        %v696 = vpop.f32.mrb[0].mxu0
        %v697 = vadd.f32 %v595, %v696
        %v698 = vpop.f32.mrb[0].mxu0
        %699 = vdwg.mxu0
        %v701 = vsel %vm386, %v469, 0
        %v704 = vsel %vm386, %v565, 0
        %v707 = vsel %vm386, %v570, 0
        %709 = vmatprep.subr.mxu0 0.0
        %710 = vmatpush1.xpose.msra.mxu0 %v704
        %711 = vmatprep.subr.mxu0 0.0
        %712 = vmatpush1.xpose.msra.mxu0 %v707
        %713 = vmatprep.subr.mxu0 0.0
        %714 = vmatpush1.xpose.msra.mxu0 0.0
        %715 = vmatprep.subr.mxu0 0.0
        %716 = vmatpush1.xpose.msra.mxu0 0.0
        %717 = vmatprep.subr.mxu0 0.0
        %718 = vmatpush1.xpose.msra.mxu0 0.0
        %719 = vmatprep.subr.mxu0 0.0
        %720 = vmatpush1.xpose.msra.mxu0 0.0
        %721 = vmatprep.subr.mxu0 0.0
        %722 = vmatpush1.xpose.msra.mxu0 0.0
        %723 = vmatprep.subr.mxu0 0.0
        %724 = vmatpush1.xpose.msra.mxu0 0.0
        %725 = vmatprep.subr.mxu0 0.0
        %726 = vmatpush1.xpose.msra.mxu0 0.0
        %727 = vmatprep.subr.mxu0 0.0
        %728 = vmatpush1.xpose.msra.mxu0 0.0
        %729 = vmatprep.subr.mxu0 0.0
        %730 = vmatpush1.xpose.msra.mxu0 0.0
        %731 = vmatprep.subr.mxu0 0.0
        %732 = vmatpush1.xpose.msra.mxu0 0.0
        %733 = vmatprep.subr.mxu0 0.0
        %734 = vmatpush1.xpose.msra.mxu0 0.0
        %735 = vmatprep.subr.mxu0 0.0
        %736 = vmatpush1.xpose.msra.mxu0 0.0
        %737 = vmatprep.subr.mxu0 0.0
        %738 = vmatpush1.xpose.msra.mxu0 0.0
        %739 = vmatprep.subr.mxu0 0.0
        %740 = vmatpush1.xpose.msra.mxu0 0.0
        %741 = vmatprep.subr.mxu0 0.0
        %742 = vmatpush1.xpose.msra.mxu0 0.0
        %743 = vmatprep.subr.mxu0 0.0
        %744 = vmatpush1.xpose.msra.mxu0 0.0
        %745 = vmatprep.subr.mxu0 0.0
        %746 = vmatpush1.xpose.msra.mxu0 0.0
        %747 = vmatprep.subr.mxu0 0.0
        %748 = vmatpush1.xpose.msra.mxu0 0.0
        %749 = vmatprep.subr.mxu0 0.0
        %750 = vmatpush1.xpose.msra.mxu0 0.0
        %751 = vmatprep.subr.mxu0 0.0
        %752 = vmatpush1.xpose.msra.mxu0 0.0
        %753 = vmatprep.subr.mxu0 0.0
        %754 = vmatpush1.xpose.msra.mxu0 0.0
        %755 = vmatprep.subr.mxu0 0.0
        %756 = vmatpush1.xpose.msra.mxu0 0.0
        %757 = vmatprep.subr.mxu0 0.0
        %758 = vmatpush1.xpose.msra.mxu0 0.0
        %759 = vmatprep.subr.mxu0 0.0
        %760 = vmatpush1.xpose.msra.mxu0 0.0
        %761 = vmatprep.subr.mxu0 0.0
        %762 = vmatpush1.xpose.msra.mxu0 0.0
        %763 = vmatprep.subr.mxu0 0.0
        %764 = vmatpush1.xpose.msra.mxu0 0.0
        %765 = vmatprep.subr.mxu0 0.0
        %766 = vmatpush1.xpose.msra.mxu0 0.0
        %767 = vmatprep.subr.mxu0 0.0
        %768 = vmatpush1.xpose.msra.mxu0 0.0
        %769 = vmatprep.subr.mxu0 0.0
        %770 = vmatpush1.xpose.msra.mxu0 0.0
        %771 = vmatprep.subr.mxu0 0.0
        %772 = vmatpush1.xpose.msra.mxu0 0.0
        %773 = vmatprep.mubr.f32.mxu0 0.0
        %774 = vmatmul.mubr.f32.gmra.mrb[0].mxu0 %v701
        %v775 = vpop.f32.mrb[0].mxu0
        %v776 = vadd.f32 0.0, %v775
        %v777 = vpop.f32.mrb[0].mxu0
        %778 = vdwg.mxu0
        %v779 = vmul.f32 %v776, 0.17677669
        %vm780 = vcmask 130048
        %v781 = vsel %vm780, %v779, -inf
        %782 = vmax.xlane.f32.xlu0 %v781
        %v783 = vpop.xlane.xlu0 %782
        %v784 = vsub.f32 %v779, %v783
        %v785 = vmul.f32 %v784, 1.442695
        %v786 = vpow.pop %v785
        %v787 = vsel %vm780, %v786, 0.0
        %788 = vadd.xlane.f32.xlu0 %v787
        %v789 = vpop.xlane.xlu0 %788
        %v790 = vrcp.pop %v789
        %v791 = vmul.f32 %v786, %v790
        %v793 = vsel %vm780, %v682, 0
        %v796 = vsel %vm780, %v687, 0
        %v799 = vsel %vm780, %v692, 0
        %v802 = vsel %vm780, %v697, 0
        %v805 = vsel %vm780, %v791, 0
        %807 = vmatprep.subr.mxu0 0.0
        %808 = vmatpush1.xpose.msra.mxu0 %v805
        %809 = vmatprep.subr.mxu0 0.0
        %810 = vmatpush1.xpose.msra.mxu0 0.0
        %811 = vmatprep.subr.mxu0 0.0
        %812 = vmatpush1.xpose.msra.mxu0 0.0
        %813 = vmatprep.subr.mxu0 0.0
        %814 = vmatpush1.xpose.msra.mxu0 0.0
        %815 = vmatprep.subr.mxu0 0.0
        %816 = vmatpush1.xpose.msra.mxu0 0.0
        %817 = vmatprep.subr.mxu0 0.0
        %818 = vmatpush1.xpose.msra.mxu0 0.0
        %819 = vmatprep.subr.mxu0 0.0
        %820 = vmatpush1.xpose.msra.mxu0 0.0
        %821 = vmatprep.subr.mxu0 0.0
        %822 = vmatpush1.xpose.msra.mxu0 0.0
        %823 = vmatprep.subr.mxu0 0.0
        %824 = vmatpush1.xpose.msra.mxu0 0.0
        %825 = vmatprep.subr.mxu0 0.0
        %826 = vmatpush1.xpose.msra.mxu0 0.0
        %827 = vmatprep.subr.mxu0 0.0
        %828 = vmatpush1.xpose.msra.mxu0 0.0
        %829 = vmatprep.subr.mxu0 0.0
        %830 = vmatpush1.xpose.msra.mxu0 0.0
        %831 = vmatprep.subr.mxu0 0.0
        %832 = vmatpush1.xpose.msra.mxu0 0.0
        %833 = vmatprep.subr.mxu0 0.0
        %834 = vmatpush1.xpose.msra.mxu0 0.0
        %835 = vmatprep.subr.mxu0 0.0
        %836 = vmatpush1.xpose.msra.mxu0 0.0
        %837 = vmatprep.subr.mxu0 0.0
        %838 = vmatpush1.xpose.msra.mxu0 0.0
        %839 = vmatprep.subr.mxu0 0.0
        %840 = vmatpush1.xpose.msra.mxu0 0.0
        %841 = vmatprep.subr.mxu0 0.0
        %842 = vmatpush1.xpose.msra.mxu0 0.0
        %843 = vmatprep.subr.mxu0 0.0
        %844 = vmatpush1.xpose.msra.mxu0 0.0
        %845 = vmatprep.subr.mxu0 0.0
        %846 = vmatpush1.xpose.msra.mxu0 0.0
        %847 = vmatprep.subr.mxu0 0.0
        %848 = vmatpush1.xpose.msra.mxu0 0.0
        %849 = vmatprep.subr.mxu0 0.0
        %850 = vmatpush1.xpose.msra.mxu0 0.0
        %851 = vmatprep.subr.mxu0 0.0
        %852 = vmatpush1.xpose.msra.mxu0 0.0
        %853 = vmatprep.subr.mxu0 0.0
        %854 = vmatpush1.xpose.msra.mxu0 0.0
        %855 = vmatprep.subr.mxu0 0.0
        %856 = vmatpush1.xpose.msra.mxu0 0.0
        %857 = vmatprep.subr.mxu0 0.0
        %858 = vmatpush1.xpose.msra.mxu0 0.0
        %859 = vmatprep.subr.mxu0 0.0
        %860 = vmatpush1.xpose.msra.mxu0 0.0
        %861 = vmatprep.subr.mxu0 0.0
        %862 = vmatpush1.xpose.msra.mxu0 0.0
        %863 = vmatprep.subr.mxu0 0.0
        %864 = vmatpush1.xpose.msra.mxu0 0.0
        %865 = vmatprep.subr.mxu0 0.0
        %866 = vmatpush1.xpose.msra.mxu0 0.0
        %867 = vmatprep.subr.mxu0 0.0
        %868 = vmatpush1.xpose.msra.mxu0 0.0
        %869 = vmatprep.subr.mxu0 0.0
        %870 = vmatpush1.xpose.msra.mxu0 0.0
        %871 = vmatprep.mubr.f32.mxu0 0.0
        %872 = vmatmul.mubr.f32.gmra.mrb[0].mxu0 %v793
        %v873 = vpop.f32.mrb[0].mxu0
        %v874 = vadd.f32 0.0, %v873
        %v875 = vpop.f32.mrb[0].mxu0
        %876 = vmatprep.mubr.f32.mxu0 0.0
        %877 = vmatmul.mubr.f32.gmra.mrb[0].mxu0 %v796
        %v878 = vpop.f32.mrb[0].mxu0
        %v879 = vadd.f32 0.0, %v878
        %v880 = vpop.f32.mrb[0].mxu0
        %881 = vmatprep.mubr.f32.mxu0 0.0
        %882 = vmatmul.mubr.f32.gmra.mrb[0].mxu0 %v799
        %v883 = vpop.f32.mrb[0].mxu0
        %v884 = vadd.f32 0.0, %v883
        %v885 = vpop.f32.mrb[0].mxu0
        %886 = vmatprep.mubr.f32.mxu0 0.0
        %887 = vmatmul.mubr.f32.gmra.mrb[0].mxu0 %v802
        %v888 = vpop.f32.mrb[0].mxu0
        %v889 = vadd.f32 0.0, %v888
        %v890 = vpop.f32.mrb[0].mxu0
        %891 = vdwg.mxu0
        %v892 = vld [vmem:[%s6] sm:$0xff]
        %v893 = vld [vmem:[%s6 + $0x8] sm:$0xff]
        %v894 = vld [vmem:[%s6 + $0x10] sm:$0xff]
        %v895 = vld [vmem:[%s6 + $0x18] sm:$0xff]
        %vm896 = vcmask 64512
        %v898 = vsel %vm896, %v874, 0
        %v901 = vsel %vm896, %v892, 0
        %v904 = vsel %vm896, %v893, 0
        %v907 = vsel %vm896, %v894, 0
        %v910 = vsel %vm896, %v895, 0
        %912 = vmatprep.subr.mxu0 0.0
        %913 = vmatpush1.xpose.msra.mxu0 %v901
        %914 = vmatprep.subr.mxu0 0.0
        %915 = vmatpush1.xpose.msra.mxu0 %v904
        %916 = vmatprep.subr.mxu0 0.0
        %917 = vmatpush1.xpose.msra.mxu0 %v907
        %918 = vmatprep.subr.mxu0 0.0
        %919 = vmatpush1.xpose.msra.mxu0 %v910
        %920 = vmatprep.subr.mxu0 0.0
        %921 = vmatpush1.xpose.msra.mxu0 0.0
        %922 = vmatprep.subr.mxu0 0.0
        %923 = vmatpush1.xpose.msra.mxu0 0.0
        %924 = vmatprep.subr.mxu0 0.0
        %925 = vmatpush1.xpose.msra.mxu0 0.0
        %926 = vmatprep.subr.mxu0 0.0
        %927 = vmatpush1.xpose.msra.mxu0 0.0
        %928 = vmatprep.subr.mxu0 0.0
        %929 = vmatpush1.xpose.msra.mxu0 0.0
        %930 = vmatprep.subr.mxu0 0.0
        %931 = vmatpush1.xpose.msra.mxu0 0.0
        %932 = vmatprep.subr.mxu0 0.0
        %933 = vmatpush1.xpose.msra.mxu0 0.0
        %934 = vmatprep.subr.mxu0 0.0
        %935 = vmatpush1.xpose.msra.mxu0 0.0
        %936 = vmatprep.subr.mxu0 0.0
        %937 = vmatpush1.xpose.msra.mxu0 0.0
        %938 = vmatprep.subr.mxu0 0.0
        %939 = vmatpush1.xpose.msra.mxu0 0.0
        %940 = vmatprep.subr.mxu0 0.0
        %941 = vmatpush1.xpose.msra.mxu0 0.0
        %942 = vmatprep.subr.mxu0 0.0
        %943 = vmatpush1.xpose.msra.mxu0 0.0
        %944 = vmatprep.subr.mxu0 0.0
        %945 = vmatpush1.xpose.msra.mxu0 0.0
        %946 = vmatprep.subr.mxu0 0.0
        %947 = vmatpush1.xpose.msra.mxu0 0.0
        %948 = vmatprep.subr.mxu0 0.0
        %949 = vmatpush1.xpose.msra.mxu0 0.0
        %950 = vmatprep.subr.mxu0 0.0
        %951 = vmatpush1.xpose.msra.mxu0 0.0
        %952 = vmatprep.subr.mxu0 0.0
        %953 = vmatpush1.xpose.msra.mxu0 0.0
        %954 = vmatprep.subr.mxu0 0.0
        %955 = vmatpush1.xpose.msra.mxu0 0.0
        %956 = vmatprep.subr.mxu0 0.0
        %957 = vmatpush1.xpose.msra.mxu0 0.0
        %958 = vmatprep.subr.mxu0 0.0
        %959 = vmatpush1.xpose.msra.mxu0 0.0
        %960 = vmatprep.subr.mxu0 0.0
        %961 = vmatpush1.xpose.msra.mxu0 0.0
        %962 = vmatprep.subr.mxu0 0.0
        %963 = vmatpush1.xpose.msra.mxu0 0.0
        %964 = vmatprep.subr.mxu0 0.0
        %965 = vmatpush1.xpose.msra.mxu0 0.0
        %966 = vmatprep.subr.mxu0 0.0
        %967 = vmatpush1.xpose.msra.mxu0 0.0
        %968 = vmatprep.subr.mxu0 0.0
        %969 = vmatpush1.xpose.msra.mxu0 0.0
        %970 = vmatprep.subr.mxu0 0.0
        %971 = vmatpush1.xpose.msra.mxu0 0.0
        %972 = vmatprep.subr.mxu0 0.0
        %973 = vmatpush1.xpose.msra.mxu0 0.0
        %974 = vmatprep.subr.mxu0 0.0
        %975 = vmatpush1.xpose.msra.mxu0 0.0
        %976 = vmatprep.mubr.f32.mxu0 0.0
        %977 = vmatmul.mubr.f32.gmra.mrb[0].mxu0 %v898
        %v978 = vpop.f32.mrb[0].mxu0
        %v979 = vadd.f32 0.0, %v978
        %v980 = vpop.f32.mrb[0].mxu0
        %981 = vdwg.mxu0
        %v982 = vlaneseq
        %v983 = vshrl.u32 %v982, 7
        %v984 = vsub.s32 2, %v983
        %v985 = vrot.slane %v373, %v984
        %v986 = vadd.f32 %v985, %v979
        %s987 = scalar_lea.vmem %s6, 32
        %v988 = vld [vmem:[%s987] sm:$0xff]
        %v989 = vld [vmem:[%s987 + $0x8] sm:$0xff]
        %v990 = vld [vmem:[%s987 + $0x10] sm:$0xff]
        %v991 = vld [vmem:[%s987 + $0x18] sm:$0xff]
        %v993 = vsel %vm896, %v879, 0
        %v996 = vsel %vm896, %v988, 0
        %v999 = vsel %vm896, %v989, 0
        %v1002 = vsel %vm896, %v990, 0
        %v1005 = vsel %vm896, %v991, 0
        %1007 = vmatprep.subr.mxu0 0.0
        %1008 = vmatpush1.xpose.msra.mxu0 %v996
        %1009 = vmatprep.subr.mxu0 0.0
        %1010 = vmatpush1.xpose.msra.mxu0 %v999
        %1011 = vmatprep.subr.mxu0 0.0
        %1012 = vmatpush1.xpose.msra.mxu0 %v1002
        %1013 = vmatprep.subr.mxu0 0.0
        %1014 = vmatpush1.xpose.msra.mxu0 %v1005
        %1015 = vmatprep.subr.mxu0 0.0
        %1016 = vmatpush1.xpose.msra.mxu0 0.0
        %1017 = vmatprep.subr.mxu0 0.0
        %1018 = vmatpush1.xpose.msra.mxu0 0.0
        %1019 = vmatprep.subr.mxu0 0.0
        %1020 = vmatpush1.xpose.msra.mxu0 0.0
        %1021 = vmatprep.subr.mxu0 0.0
        %1022 = vmatpush1.xpose.msra.mxu0 0.0
        %1023 = vmatprep.subr.mxu0 0.0
        %1024 = vmatpush1.xpose.msra.mxu0 0.0
        %1025 = vmatprep.subr.mxu0 0.0
        %1026 = vmatpush1.xpose.msra.mxu0 0.0
        %1027 = vmatprep.subr.mxu0 0.0
        %1028 = vmatpush1.xpose.msra.mxu0 0.0
        %1029 = vmatprep.subr.mxu0 0.0
        %1030 = vmatpush1.xpose.msra.mxu0 0.0
        %1031 = vmatprep.subr.mxu0 0.0
        %1032 = vmatpush1.xpose.msra.mxu0 0.0
        %1033 = vmatprep.subr.mxu0 0.0
        %1034 = vmatpush1.xpose.msra.mxu0 0.0
        %1035 = vmatprep.subr.mxu0 0.0
        %1036 = vmatpush1.xpose.msra.mxu0 0.0
        %1037 = vmatprep.subr.mxu0 0.0
        %1038 = vmatpush1.xpose.msra.mxu0 0.0
        %1039 = vmatprep.subr.mxu0 0.0
        %1040 = vmatpush1.xpose.msra.mxu0 0.0
        %1041 = vmatprep.subr.mxu0 0.0
        %1042 = vmatpush1.xpose.msra.mxu0 0.0
        %1043 = vmatprep.subr.mxu0 0.0
        %1044 = vmatpush1.xpose.msra.mxu0 0.0
        %1045 = vmatprep.subr.mxu0 0.0
        %1046 = vmatpush1.xpose.msra.mxu0 0.0
        %1047 = vmatprep.subr.mxu0 0.0
        %1048 = vmatpush1.xpose.msra.mxu0 0.0
        %1049 = vmatprep.subr.mxu0 0.0
        %1050 = vmatpush1.xpose.msra.mxu0 0.0
        %1051 = vmatprep.subr.mxu0 0.0
        %1052 = vmatpush1.xpose.msra.mxu0 0.0
        %1053 = vmatprep.subr.mxu0 0.0
        %1054 = vmatpush1.xpose.msra.mxu0 0.0
        %1055 = vmatprep.subr.mxu0 0.0
        %1056 = vmatpush1.xpose.msra.mxu0 0.0
        %1057 = vmatprep.subr.mxu0 0.0
        %1058 = vmatpush1.xpose.msra.mxu0 0.0
        %1059 = vmatprep.subr.mxu0 0.0
        %1060 = vmatpush1.xpose.msra.mxu0 0.0
        %1061 = vmatprep.subr.mxu0 0.0
        %1062 = vmatpush1.xpose.msra.mxu0 0.0
        %1063 = vmatprep.subr.mxu0 0.0
        %1064 = vmatpush1.xpose.msra.mxu0 0.0
        %1065 = vmatprep.subr.mxu0 0.0
        %1066 = vmatpush1.xpose.msra.mxu0 0.0
        %1067 = vmatprep.subr.mxu0 0.0
        %1068 = vmatpush1.xpose.msra.mxu0 0.0
        %1069 = vmatprep.subr.mxu0 0.0
        %1070 = vmatpush1.xpose.msra.mxu0 0.0
        %1071 = vmatprep.mubr.f32.mxu0 0.0
        %1072 = vmatmul.mubr.f32.gmra.mrb[0].mxu0 %v993
        %v1073 = vpop.f32.mrb[0].mxu0
        %v1074 = vadd.f32 0.0, %v1073
        %v1075 = vpop.f32.mrb[0].mxu0
        %1076 = vdwg.mxu0
        %v1077 = vadd.f32 %v986, %v1074
        %s1078 = scalar_lea.vmem %s6, 64
        %v1079 = vld [vmem:[%s1078] sm:$0xff]
        %v1080 = vld [vmem:[%s1078 + $0x8] sm:$0xff]
        %v1081 = vld [vmem:[%s1078 + $0x10] sm:$0xff]
        %v1082 = vld [vmem:[%s1078 + $0x18] sm:$0xff]
        %v1084 = vsel %vm896, %v884, 0
        %v1087 = vsel %vm896, %v1079, 0
        %v1090 = vsel %vm896, %v1080, 0
        %v1093 = vsel %vm896, %v1081, 0
        %v1096 = vsel %vm896, %v1082, 0
        %1098 = vmatprep.subr.mxu0 0.0
        %1099 = vmatpush1.xpose.msra.mxu0 %v1087
        %1100 = vmatprep.subr.mxu0 0.0
        %1101 = vmatpush1.xpose.msra.mxu0 %v1090
        %1102 = vmatprep.subr.mxu0 0.0
        %1103 = vmatpush1.xpose.msra.mxu0 %v1093
        %1104 = vmatprep.subr.mxu0 0.0
        %1105 = vmatpush1.xpose.msra.mxu0 %v1096
        %1106 = vmatprep.subr.mxu0 0.0
        %1107 = vmatpush1.xpose.msra.mxu0 0.0
        %1108 = vmatprep.subr.mxu0 0.0
        %1109 = vmatpush1.xpose.msra.mxu0 0.0
        %1110 = vmatprep.subr.mxu0 0.0
        %1111 = vmatpush1.xpose.msra.mxu0 0.0
        %1112 = vmatprep.subr.mxu0 0.0
        %1113 = vmatpush1.xpose.msra.mxu0 0.0
        %1114 = vmatprep.subr.mxu0 0.0
        %1115 = vmatpush1.xpose.msra.mxu0 0.0
        %1116 = vmatprep.subr.mxu0 0.0
        %1117 = vmatpush1.xpose.msra.mxu0 0.0
        %1118 = vmatprep.subr.mxu0 0.0
        %1119 = vmatpush1.xpose.msra.mxu0 0.0
        %1120 = vmatprep.subr.mxu0 0.0
        %1121 = vmatpush1.xpose.msra.mxu0 0.0
        %1122 = vmatprep.subr.mxu0 0.0
        %1123 = vmatpush1.xpose.msra.mxu0 0.0
        %1124 = vmatprep.subr.mxu0 0.0
        %1125 = vmatpush1.xpose.msra.mxu0 0.0
        %1126 = vmatprep.subr.mxu0 0.0
        %1127 = vmatpush1.xpose.msra.mxu0 0.0
        %1128 = vmatprep.subr.mxu0 0.0
        %1129 = vmatpush1.xpose.msra.mxu0 0.0
        %1130 = vmatprep.subr.mxu0 0.0
        %1131 = vmatpush1.xpose.msra.mxu0 0.0
        %1132 = vmatprep.subr.mxu0 0.0
        %1133 = vmatpush1.xpose.msra.mxu0 0.0
        %1134 = vmatprep.subr.mxu0 0.0
        %1135 = vmatpush1.xpose.msra.mxu0 0.0
        %1136 = vmatprep.subr.mxu0 0.0
        %1137 = vmatpush1.xpose.msra.mxu0 0.0
        %1138 = vmatprep.subr.mxu0 0.0
        %1139 = vmatpush1.xpose.msra.mxu0 0.0
        %1140 = vmatprep.subr.mxu0 0.0
        %1141 = vmatpush1.xpose.msra.mxu0 0.0
        %1142 = vmatprep.subr.mxu0 0.0
        %1143 = vmatpush1.xpose.msra.mxu0 0.0
        %1144 = vmatprep.subr.mxu0 0.0
        %1145 = vmatpush1.xpose.msra.mxu0 0.0
        %1146 = vmatprep.subr.mxu0 0.0
        %1147 = vmatpush1.xpose.msra.mxu0 0.0
        %1148 = vmatprep.subr.mxu0 0.0
        %1149 = vmatpush1.xpose.msra.mxu0 0.0
        %1150 = vmatprep.subr.mxu0 0.0
        %1151 = vmatpush1.xpose.msra.mxu0 0.0
        %1152 = vmatprep.subr.mxu0 0.0
        %1153 = vmatpush1.xpose.msra.mxu0 0.0
        %1154 = vmatprep.subr.mxu0 0.0
        %1155 = vmatpush1.xpose.msra.mxu0 0.0
        %1156 = vmatprep.subr.mxu0 0.0
        %1157 = vmatpush1.xpose.msra.mxu0 0.0
        %1158 = vmatprep.subr.mxu0 0.0
        %1159 = vmatpush1.xpose.msra.mxu0 0.0
        %1160 = vmatprep.subr.mxu0 0.0
        %1161 = vmatpush1.xpose.msra.mxu0 0.0
        %1162 = vmatprep.mubr.f32.mxu0 0.0
        %1163 = vmatmul.mubr.f32.gmra.mrb[0].mxu0 %v1084
        %v1164 = vpop.f32.mrb[0].mxu0
        %v1165 = vadd.f32 0.0, %v1164
        %v1166 = vpop.f32.mrb[0].mxu0
        %1167 = vdwg.mxu0
        %v1168 = vadd.f32 %v1077, %v1165
        %s1169 = scalar_lea.vmem %s6, 96
        %v1170 = vld [vmem:[%s1169] sm:$0xff]
        %v1171 = vld [vmem:[%s1169 + $0x8] sm:$0xff]
        %v1172 = vld [vmem:[%s1169 + $0x10] sm:$0xff]
        %v1173 = vld [vmem:[%s1169 + $0x18] sm:$0xff]
        %v1175 = vsel %vm896, %v889, 0
        %v1178 = vsel %vm896, %v1170, 0
        %v1181 = vsel %vm896, %v1171, 0
        %v1184 = vsel %vm896, %v1172, 0
        %v1187 = vsel %vm896, %v1173, 0
        %1189 = vmatprep.subr.mxu0 0.0
        %1190 = vmatpush1.xpose.msra.mxu0 %v1178
        %1191 = vmatprep.subr.mxu0 0.0
        %1192 = vmatpush1.xpose.msra.mxu0 %v1181
        %1193 = vmatprep.subr.mxu0 0.0
        %1194 = vmatpush1.xpose.msra.mxu0 %v1184
        %1195 = vmatprep.subr.mxu0 0.0
        %1196 = vmatpush1.xpose.msra.mxu0 %v1187
        %1197 = vmatprep.subr.mxu0 0.0
        %1198 = vmatpush1.xpose.msra.mxu0 0.0
        %1199 = vmatprep.subr.mxu0 0.0
        %1200 = vmatpush1.xpose.msra.mxu0 0.0
        %1201 = vmatprep.subr.mxu0 0.0
        %1202 = vmatpush1.xpose.msra.mxu0 0.0
        %1203 = vmatprep.subr.mxu0 0.0
        %1204 = vmatpush1.xpose.msra.mxu0 0.0
        %1205 = vmatprep.subr.mxu0 0.0
        %1206 = vmatpush1.xpose.msra.mxu0 0.0
        %1207 = vmatprep.subr.mxu0 0.0
        %1208 = vmatpush1.xpose.msra.mxu0 0.0
        %1209 = vmatprep.subr.mxu0 0.0
        %1210 = vmatpush1.xpose.msra.mxu0 0.0
        %1211 = vmatprep.subr.mxu0 0.0
        %1212 = vmatpush1.xpose.msra.mxu0 0.0
        %1213 = vmatprep.subr.mxu0 0.0
        %1214 = vmatpush1.xpose.msra.mxu0 0.0
        %1215 = vmatprep.subr.mxu0 0.0
        %1216 = vmatpush1.xpose.msra.mxu0 0.0
        %1217 = vmatprep.subr.mxu0 0.0
        %1218 = vmatpush1.xpose.msra.mxu0 0.0
        %1219 = vmatprep.subr.mxu0 0.0
        %1220 = vmatpush1.xpose.msra.mxu0 0.0
        %1221 = vmatprep.subr.mxu0 0.0
        %1222 = vmatpush1.xpose.msra.mxu0 0.0
        %1223 = vmatprep.subr.mxu0 0.0
        %1224 = vmatpush1.xpose.msra.mxu0 0.0
        %1225 = vmatprep.subr.mxu0 0.0
        %1226 = vmatpush1.xpose.msra.mxu0 0.0
        %1227 = vmatprep.subr.mxu0 0.0
        %1228 = vmatpush1.xpose.msra.mxu0 0.0
        %1229 = vmatprep.subr.mxu0 0.0
        %1230 = vmatpush1.xpose.msra.mxu0 0.0
        %1231 = vmatprep.subr.mxu0 0.0
        %1232 = vmatpush1.xpose.msra.mxu0 0.0
        %1233 = vmatprep.subr.mxu0 0.0
        %1234 = vmatpush1.xpose.msra.mxu0 0.0
        %1235 = vmatprep.subr.mxu0 0.0
        %1236 = vmatpush1.xpose.msra.mxu0 0.0
        %1237 = vmatprep.subr.mxu0 0.0
        %1238 = vmatpush1.xpose.msra.mxu0 0.0
        %1239 = vmatprep.subr.mxu0 0.0
        %1240 = vmatpush1.xpose.msra.mxu0 0.0
        %1241 = vmatprep.subr.mxu0 0.0
        %1242 = vmatpush1.xpose.msra.mxu0 0.0
        %1243 = vmatprep.subr.mxu0 0.0
        %1244 = vmatpush1.xpose.msra.mxu0 0.0
        %1245 = vmatprep.subr.mxu0 0.0
        %1246 = vmatpush1.xpose.msra.mxu0 0.0
        %1247 = vmatprep.subr.mxu0 0.0
        %1248 = vmatpush1.xpose.msra.mxu0 0.0
        %1249 = vmatprep.subr.mxu0 0.0
        %1250 = vmatpush1.xpose.msra.mxu0 0.0
        %1251 = vmatprep.subr.mxu0 0.0
        %1252 = vmatpush1.xpose.msra.mxu0 0.0
        %1253 = vmatprep.mubr.f32.mxu0 0.0
        %1254 = vmatmul.mubr.f32.gmra.mrb[0].mxu0 %v1175
        %v1255 = vpop.f32.mrb[0].mxu0
        %v1256 = vadd.f32 0.0, %v1255
        %v1257 = vpop.f32.mrb[0].mxu0
        %1258 = vdwg.mxu0
        %v1259 = vadd.f32 %v1168, %v1256
        %v1260 = vadd.f32 %v368, %v1259
        %v1261 = vsel %vm386, %v1260, 0.0
        %1262 = vadd.xlane.f32.xlu0 %v1261
        %v1263 = vpop.xlane.xlu0 %1262
        %v1264 = vrcp.pop 32.0
        %v1265 = vmul.f32 %v1263, %v1264
        %v1266 = vsub.f32 %v1260, %v1265
        %v1267 = vmul.f32 %v1266, %v1266
        %v1268 = vsel %vm386, %v1267, 0.0
        %1269 = vadd.xlane.f32.xlu0 %v1268
        %v1270 = vpop.xlane.xlu0 %1269
        %v1271 = vmul.f32 %v1270, %v1264
        %v1272 = vadd.f32 %v1271, 1e-05
        %v1273 = vrsqrt.pop %v1272
        %v1274 = vmul.f32 %v1266, %v1273
        %v1275 = vlaneseq
        %v1276 = vshrl.u32 %v1275, 7
        %v1277 = vsub.s32 3, %v1276
        %v1278 = vrot.slane %v373, %v1277
        %v1279 = vmul.f32 %v1274, %v1278
        %v1280 = vlaneseq
        %v1281 = vshrl.u32 %v1280, 7
        %v1282 = vsub.s32 4, %v1281
        %v1283 = vrot.slane %v373, %v1282
        %v1284 = vadd.f32 %v1279, %v1283
        %1285 = vst.msk [vmem:[%s353] sm:$0xff] %vm386, %v1284
        %s1286 = sand.u32 %s235, 1
        %s1287 = scalar_lea.sflag [#allocation3], %s1286
        %s1288 = sand.u32 %s235, 1
        %s1289 = smul.addr %s1288, 8
        %s1290 = scalar_lea.vmem [#allocation2], %s1289
        // Predicated region
        $region57: #{tpu_custom_call.1} parent=55 // pred_check
          %p1291 = pneg %p245
        $region58: #{tpu_custom_call.1} parent=55 // pred_check_branch
          %1293 = sbr.rel (%p1291) target = $region60
        $region59: #{tpu_custom_call.1} parent=55 // pred_region
          %s1295 = ssub.s32 128, 128
          %1296 = vsyncadd %s1287, %s1295
          %s1297 = smul.addr %s23, 128
          %s1298 = scalar_lea.hbm %s9, %s1297
          %s1300 = sshll.u32 %s1290, 4
          %s1301 = int_to_ptr.vmem [resolvable:$true] %s1300
          %1303 = dma.vmem_to_hbm [thread:$0]  %s1301, 128, %s1298, %s1287
        $region60: #{tpu_custom_call.1} parent=55 // pred_fallthru
          _
      $region56: #{tpu_custom_call.1} parent=5 // pred_fallthru
        _
      %p1304 = scmp.le.s32.totalorder 2, %s18
      // Predicated region
      $region61: #{tpu_custom_call.1} parent=5 // pred_check
        %p1305 = pneg %p1304
      $region62: #{tpu_custom_call.1} parent=5 // pred_check_branch
        %1307 = sbr.rel (%p1305) target = $region64
      $region63: #{tpu_custom_call.1} parent=5 // pred_region
        %s1308 = ssub.s32 %s18, 2
        // Predicated region
        $region65: #{tpu_custom_call.1} parent=63 // pred_check
          %p1309 = pneg %p251
        $region66: #{tpu_custom_call.1} parent=63 // pred_check_branch
          %1311 = sbr.rel (%p1309) target = $region68
        $region67: #{tpu_custom_call.1} parent=63 // pred_region
          %s1312 = sand.u32 %s236, 1
          %s1313 = scalar_lea.sflag [#allocation3], %s1312
          %s1314 = sand.u32 %s236, 1
          %s1315 = smul.addr %s1314, 8
          %s1316 = scalar_lea.vmem [#allocation2], %s1315
          %1317 = dma.done %s1313, 128
        $region68: #{tpu_custom_call.1} parent=63 // pred_fallthru
          _
      $region64: #{tpu_custom_call.1} parent=5 // pred_fallthru
        _
    $region6: #{tpu_custom_call.1} parent=1 // loop_footer
      %s22 = sadd.s32 1, %s18
    $region7: #{tpu_custom_call.1} parent=1 // loop_footer_branch
      %17 = sbr.rel target = $region3
    $region8: #{tpu_custom_call.1} parent=1 // loop_exit
      _
    %1318 = vsyncpa [#allocation3], 1
    %s1319 = scalar_lea.sflag [#allocation3], 1
    %1320 = vsyncpa %s1319, 1

</llo_original>
